<compile_context>
chip_gen: v7x
topology: tpu7x:2x2x1
jax: 0.10.0
libtpu: 0.0.40
codegen_flags: <defaults>
</compile_context>

<pallas_src>
import functools

import jax
import jax.numpy as jnp
from jax import lax
from jax.experimental import pallas as pl
from jax.experimental.pallas import tpu as pltpu


def _round_up(x, m):
    return (x + m - 1) // m * m


def _softplus(x):
    # numerically stable softplus, elementwise (VPU + EUP), kept in f32
    return jnp.maximum(x, 0.0) + jnp.log1p(jnp.exp(-jnp.abs(x)))


def cfconv_kernel(dist_ref, idx_i_ref, centers_ref, w1_ref, b1_ref,
                  w2_ref, b2_ref, xj_ref, out_ref, *,
                  gamma, n_atoms_p, mxu_dtype):
    # out block is resident across the trailing (edge) grid axis: accumulate.
    @pl.when(pl.program_id(1) == 0)
    def _():
        out_ref[...] = jnp.zeros_like(out_ref)

    # --- radial basis expansion (elementwise, f32 on VPU/EUP) ---------------
    d = dist_ref[...]                                    # (TE, 1) f32
    diff = d - centers_ref[...]                          # (TE, RBFp)
    rbf = jnp.exp(-gamma * diff * diff)                  # (TE, RBFp) f32

    # --- filter-generating MLP (MXU, bf16 operands, f32 accumulate) ---------
    h = _softplus(
        jnp.dot(rbf.astype(mxu_dtype), w1_ref[...],
                preferred_element_type=jnp.float32) + b1_ref[...])
    wij = _softplus(
        jnp.dot(h.astype(mxu_dtype), w2_ref[...],
                preferred_element_type=jnp.float32) + b2_ref[...])   # (TE, FT)

    # --- continuous-filter conv: pre-gathered X[idx_j] * Wij ----------------
    x_ij = xj_ref[...] * wij                             # (TE, FT) f32

    # --- scatter-add via pre-transposed one-hot matmul (Np, TE) @ (TE, FT) --
    te = x_ij.shape[0]
    atom_iota = lax.broadcasted_iota(jnp.int32, (n_atoms_p, te), 0)
    oh_i = (idx_i_ref[...] == atom_iota).astype(mxu_dtype)   # (Np, TE)
    out_ref[...] += jnp.dot(oh_i, x_ij.astype(mxu_dtype),
                            preferred_element_type=jnp.float32)


def cfconv_pallas(X, R_distances, idx_i, idx_j, centers, w1, b1, w2, b2, *,
                  gamma, edge_tile=256, feat_tile=128,
                  mxu_dtype=jnp.bfloat16):
    n_atoms, feat = X.shape
    n_rbf = centers.shape[-1]
    n_edges = R_distances.shape[0]

    # --- lane / sublane dense padding (zero pads are inert) -----------------
    feat_p = _round_up(feat, 128)
    rbf_p = _round_up(n_rbf, 128)
    n_atoms_p = _round_up(n_atoms, 8)
    feat_tile = min(feat_tile, feat_p)
    assert feat_p % feat_tile == 0 and feat_tile % 128 == 0

    Xp = jnp.pad(X.astype(jnp.float32),
                 ((0, n_atoms_p - n_atoms), (0, feat_p - feat)))
    w1_p = jnp.pad(w1.astype(jnp.float32),
                   ((0, rbf_p - n_rbf), (0, feat_p - feat))).astype(mxu_dtype)
    w2_p = jnp.pad(w2.astype(jnp.float32),
                   ((0, feat_p - feat), (0, feat_p - feat))).astype(mxu_dtype)
    b1_p = jnp.pad(b1.reshape(1, -1).astype(jnp.float32),
                   ((0, 0), (0, feat_p - feat)))
    b2_p = jnp.pad(b2.reshape(1, -1).astype(jnp.float32),
                   ((0, 0), (0, feat_p - feat)))
    centers_p = jnp.pad(centers.reshape(1, -1).astype(jnp.float32),
                        ((0, 0), (0, rbf_p - n_rbf)))

    # --- edge padding + real gather of X[idx_j] in the wrapper --------------
    n_pad = (-n_edges) % edge_tile
    e_pad = n_edges + n_pad
    dist_p = jnp.pad(R_distances.astype(jnp.float32),
                     (0, n_pad)).reshape(e_pad, 1)
    # padded edges: gathered x_j rows are zero AND idx_i == n_atoms_p (one-hot
    # column all-zero), so they contribute nothing.
    x_j = jnp.pad(Xp[idx_j], ((0, n_pad), (0, 0)))                 # (Ep, Fp)
    idx_i_p = jnp.pad(idx_i.astype(jnp.int32), (0, n_pad),
                      constant_values=n_atoms_p).reshape(1, e_pad)  # lane-major

    n_e_tiles = e_pad // edge_tile
    n_f_tiles = feat_p // feat_tile

    # --- VMEM budget: double-buffered streamed blocks + weights + resident
    #     out + live intermediates, with headroom; never below the 32 MiB
    #     default.  (Re-derive the cap for v7x's 64 MiB if tiles are raised.)
    itm = jnp.dtype(mxu_dtype).itemsize
    budget = (
        2 * edge_tile * (feat_tile * 4 + 4 + 4)                        # x_j, dist, idx_i
        + 2 * ((rbf_p * feat_p + feat_p * feat_tile) * itm
               + (feat_p + feat_tile + rbf_p) * 4)                     # W1,W2,b1,b2,centers
        + 2 * n_atoms_p * feat_tile * 4                                # resident out
        + 2 * edge_tile * (rbf_p + feat_p + feat_tile + n_atoms_p) * 4)  # live vregs
    vmem_limit = int(min(max(2 * budget + (2 << 20), 32 << 20), 96 << 20))

    kernel = functools.partial(cfconv_kernel, gamma=float(gamma),
                               n_atoms_p=n_atoms_p, mxu_dtype=mxu_dtype)

    out = pl.pallas_call(
        kernel,
        out_shape=jax.ShapeDtypeStruct((n_atoms_p, feat_p), jnp.float32),
        grid=(n_f_tiles, n_e_tiles),
        in_specs=[
            pl.BlockSpec((edge_tile, 1), lambda f, e: (e, 0)),          # dist
            pl.BlockSpec((1, edge_tile), lambda f, e: (0, e)),          # idx_i
            pl.BlockSpec((1, rbf_p), lambda f, e: (0, 0)),              # centers
            pl.BlockSpec((rbf_p, feat_p), lambda f, e: (0, 0)),         # W1
            pl.BlockSpec((1, feat_p), lambda f, e: (0, 0)),             # b1
            pl.BlockSpec((feat_p, feat_tile), lambda f, e: (0, f)),     # W2
            pl.BlockSpec((1, feat_tile), lambda f, e: (0, f)),          # b2
            pl.BlockSpec((edge_tile, feat_tile), lambda f, e: (e, f)),  # X[idx_j]
        ],
        out_specs=pl.BlockSpec((n_atoms_p, feat_tile), lambda f, e: (0, f)),
        compiler_params=pltpu.CompilerParams(
            dimension_semantics=("parallel", "arbitrary"),
            vmem_limit_bytes=vmem_limit),
    )(dist_p, idx_i_p, centers_p, w1_p, b1_p, w2_p, b2_p, x_j)

    return out[:n_atoms, :feat]


def cfconv_ref(X, R_distances, idx_i, idx_j, centers, w1, b1, w2, b2, gamma):
    diff = R_distances[:, None] - centers                      # (E, n_rbf)
    rbf = jnp.exp(-gamma * diff * diff)
    h = jax.nn.softplus(rbf @ w1 + b1)
    wij = jax.nn.softplus(h @ w2 + b2)
    x_ij = X[idx_j] * wij
    return jnp.zeros_like(X).at[idx_i].add(x_ij)


if __name__ == "__main__":
    # SchNet-ish small config
    n_atoms = 8
    feat = 32          # atom_embeddings_dim
    n_rbf = 32
    rbf_min, rbf_max, gamma = 0.0, 5.0, 10.0

    key = jax.random.PRNGKey(0)
    k_x, k_d, k_w1, k_b1, k_w2, k_b2 = jax.random.split(key, 6)

    # atom embeddings
    X = jax.random.normal(k_x, (n_atoms, feat), dtype=jnp.float32)

    # fully connected neighbor list (no self-interactions): E = N*(N-1) = 56
    ii, jj = jnp.meshgrid(jnp.arange(n_atoms), jnp.arange(n_atoms),
                          indexing="ij")
    mask = ii != jj
    idx_i = ii[mask].astype(jnp.int32)
    idx_j = jj[mask].astype(jnp.int32)
    n_edges = idx_i.shape[0]
    R_distances = jax.random.uniform(k_d, (n_edges,), dtype=jnp.float32,
                                     minval=0.5, maxval=rbf_max)

    # deterministic parameter init (PyTorch-Linear-style uniform bounds)
    centers = jnp.linspace(rbf_min, rbf_max, n_rbf,
                           dtype=jnp.float32).reshape(1, n_rbf)
    lim1 = 1.0 / jnp.sqrt(jnp.float32(n_rbf))
    lim2 = 1.0 / jnp.sqrt(jnp.float32(feat))
    w1 = jax.random.uniform(k_w1, (n_rbf, feat), jnp.float32, -lim1, lim1)
    b1 = jax.random.uniform(k_b1, (1, feat), jnp.float32, -lim1, lim1)
    w2 = jax.random.uniform(k_w2, (feat, feat), jnp.float32, -lim2, lim2)
    b2 = jax.random.uniform(k_b2, (1, feat), jnp.float32, -lim2, lim2)

    ref = cfconv_ref(X, R_distances, idx_i, idx_j,
                     centers, w1, b1, w2, b2, gamma)

    # 1) bit-faithful f32-MXU path: structural correctness, tight tolerance
    out_f32 = jax.block_until_ready(
        cfconv_pallas(X, R_distances, idx_i, idx_j, centers, w1, b1, w2, b2,
                      gamma=gamma, mxu_dtype=jnp.float32))
    assert out_f32.shape == (n_atoms, feat)
    assert jnp.allclose(out_f32, ref, atol=1e-4, rtol=1e-4), (
        float(jnp.max(jnp.abs(out_f32 - ref))))

    # 2) default fast path: bf16 MXU operands (f32 accumulate) -> compare at a
    #    bf16-appropriate tolerance against the f32 reference
    out_bf16 = jax.block_until_ready(
        cfconv_pallas(X, R_distances, idx_i, idx_j, centers, w1, b1, w2, b2,
                      gamma=gamma))
    assert out_bf16.shape == (n_atoms, feat)
    scale = float(jnp.max(jnp.abs(ref)))
    err = float(jnp.max(jnp.abs(out_bf16 - ref)))
    assert err <= 5e-2 * scale + 1e-3, (err, scale)

    print("KERNEL_OK")
</pallas_src>

<mosaic_0001>
module attributes {stable_mosaic.version = 11 : i64} {
  func.func @cfconv_kernel(%arg0: i32, %arg1: i32, %arg2: memref<256x1xf32, #tpu.memory_space<vmem>>, %arg3: memref<1x256xi32, #tpu.memory_space<vmem>>, %arg4: memref<1x128xf32, #tpu.memory_space<vmem>>, %arg5: memref<128x128xf32, #tpu.memory_space<vmem>>, %arg6: memref<1x128xf32, #tpu.memory_space<vmem>>, %arg7: memref<128x128xf32, #tpu.memory_space<vmem>>, %arg8: memref<1x128xf32, #tpu.memory_space<vmem>>, %arg9: memref<256x128xf32, #tpu.memory_space<vmem>>, %arg10: memref<8x128xf32, #tpu.memory_space<vmem>>) attributes {dimension_semantics = [#tpu.dimension_semantics<parallel>, #tpu.dimension_semantics<arbitrary>], iteration_bounds = array<i64: 1, 1>, scalar_prefetch = 0 : i64, scratch_operands = 0 : i64, tpu.core_type = #tpu.core_type<tc>, window_params = [{transform_indices = @transform_0, window_bounds = array<i64: 256, 1>}, {transform_indices = @transform_1, window_bounds = array<i64: 1, 256>}, {pipeline_mode = #tpu.pipeline_mode<synchronous>, transform_indices = @transform_2, window_bounds = array<i64: 1, 128>}, {pipeline_mode = #tpu.pipeline_mode<synchronous>, transform_indices = @transform_3, window_bounds = array<i64: 128, 128>}, {pipeline_mode = #tpu.pipeline_mode<synchronous>, transform_indices = @transform_4, window_bounds = array<i64: 1, 128>}, {transform_indices = @transform_5, window_bounds = array<i64: 128, 128>}, {transform_indices = @transform_6, window_bounds = array<i64: 1, 128>}, {transform_indices = @transform_7, window_bounds = array<i64: 256, 128>}, {transform_indices = @transform_8, window_bounds = array<i64: 8, 128>}]} {
    %c0_i32 = arith.constant 0 : i32
    %0 = arith.cmpi eq, %arg1, %c0_i32 : i32
    %1 = arith.extui %0 : i1 to i32
    %c0_i32_0 = arith.constant 0 : i32
    %2 = arith.cmpi ne, %1, %c0_i32_0 : i32
    scf.if %2 {
      %cst_27 = arith.constant 0.000000e+00 : f32
      %50 = vector.broadcast %cst_27 : f32 to vector<8x128xf32>
      %c0_28 = arith.constant 0 : index
      %c0_29 = arith.constant 0 : index
      %51 = vector.load %arg10[%c0_28, %c0_29] : memref<8x128xf32, #tpu.memory_space<vmem>>, vector<8x128xf32>
      tpu.vector_store %arg10[%c0_28, %c0_29], %50 {strides = array<i32>} : memref<8x128xf32, #tpu.memory_space<vmem>>, vector<8x128xf32>,
    } else {
    }
    %c0 = arith.constant 0 : index
    %c0_1 = arith.constant 0 : index
    %3 = vector.load %arg2[%c0, %c0_1] : memref<256x1xf32, #tpu.memory_space<vmem>>, vector<256x1xf32>
    %c0_2 = arith.constant 0 : index
    %c0_3 = arith.constant 0 : index
    %4 = vector.load %arg4[%c0_2, %c0_3] : memref<1x128xf32, #tpu.memory_space<vmem>>, vector<1x128xf32>
    %5 = vector.broadcast %3 : vector<256x1xf32> to vector<256x128xf32>
    %6 = vector.broadcast %4 : vector<1x128xf32> to vector<256x128xf32>
    %7 = arith.subf %5, %6 : vector<256x128xf32>
    %cst = arith.constant -1.000000e+01 : f32
    %8 = vector.broadcast %cst : f32 to vector<256x128xf32>
    %9 = arith.mulf %8, %7 : vector<256x128xf32>
    %10 = arith.mulf %9, %7 : vector<256x128xf32>
    %11 = math.exp %10 : vector<256x128xf32>
    %c0_4 = arith.constant 0 : index
    %c0_5 = arith.constant 0 : index
    %12 = vector.load %arg5[%c0_4, %c0_5] : memref<128x128xf32, #tpu.memory_space<vmem>>, vector<128x128xf32>
    %cst_6 = arith.constant dense<0.000000e+00> : vector<256x128xf32>
    %13 = tpu.matmul %11, %12, %cst_6 {dimension_numbers = #tpu.dot_dimension_numbers<[1], [0], [0], [1], [0, 0, 1, 1], [], []>} : vector<256x128xf32>, vector<128x128xf32>, vector<256x128xf32> -> vector<256x128xf32>
    %c0_7 = arith.constant 0 : index
    %c0_8 = arith.constant 0 : index
    %14 = vector.load %arg6[%c0_7, %c0_8] : memref<1x128xf32, #tpu.memory_space<vmem>>, vector<1x128xf32>
    %15 = vector.broadcast %14 : vector<1x128xf32> to vector<256x128xf32>
    %16 = arith.addf %13, %15 : vector<256x128xf32>
    %cst_9 = arith.constant 0.000000e+00 : f32
    %17 = vector.broadcast %cst_9 : f32 to vector<256x128xf32>
    %18 = arith.maximumf %16, %17 : vector<256x128xf32>
    %19 = math.absf %16 : vector<256x128xf32>
    %cst_10 = arith.constant 0.000000e+00 : f32
    %20 = vector.broadcast %cst_10 : f32 to vector<256x128xf32>
    %21 = arith.subf %20, %19 : vector<256x128xf32>
    %22 = math.exp %21 : vector<256x128xf32>
    %23 = math.log1p %22 : vector<256x128xf32>
    %24 = arith.addf %18, %23 : vector<256x128xf32>
    %c0_11 = arith.constant 0 : index
    %c0_12 = arith.constant 0 : index
    %25 = vector.load %arg7[%c0_11, %c0_12] : memref<128x128xf32, #tpu.memory_space<vmem>>, vector<128x128xf32>
    %cst_13 = arith.constant dense<0.000000e+00> : vector<256x128xf32>
    %26 = tpu.matmul %24, %25, %cst_13 {dimension_numbers = #tpu.dot_dimension_numbers<[1], [0], [0], [1], [0, 0, 1, 1], [], []>} : vector<256x128xf32>, vector<128x128xf32>, vector<256x128xf32> -> vector<256x128xf32>
    %c0_14 = arith.constant 0 : index
    %c0_15 = arith.constant 0 : index
    %27 = vector.load %arg8[%c0_14, %c0_15] : memref<1x128xf32, #tpu.memory_space<vmem>>, vector<1x128xf32>
    %28 = vector.broadcast %27 : vector<1x128xf32> to vector<256x128xf32>
    %29 = arith.addf %26, %28 : vector<256x128xf32>
    %cst_16 = arith.constant 0.000000e+00 : f32
    %30 = vector.broadcast %cst_16 : f32 to vector<256x128xf32>
    %31 = arith.maximumf %29, %30 : vector<256x128xf32>
    %32 = math.absf %29 : vector<256x128xf32>
    %cst_17 = arith.constant 0.000000e+00 : f32
    %33 = vector.broadcast %cst_17 : f32 to vector<256x128xf32>
    %34 = arith.subf %33, %32 : vector<256x128xf32>
    %35 = math.exp %34 : vector<256x128xf32>
    %36 = math.log1p %35 : vector<256x128xf32>
    %37 = arith.addf %31, %36 : vector<256x128xf32>
    %c0_18 = arith.constant 0 : index
    %c0_19 = arith.constant 0 : index
    %38 = vector.load %arg9[%c0_18, %c0_19] : memref<256x128xf32, #tpu.memory_space<vmem>>, vector<256x128xf32>
    %39 = arith.mulf %38, %37 : vector<256x128xf32>
    %40 = tpu.iota {dimensions = array<i32: 0>} : vector<8x256xi32>
    %c0_20 = arith.constant 0 : index
    %c0_21 = arith.constant 0 : index
    %41 = vector.load %arg3[%c0_20, %c0_21] : memref<1x256xi32, #tpu.memory_space<vmem>>, vector<1x256xi32>
    %42 = vector.broadcast %41 : vector<1x256xi32> to vector<8x256xi32>
    %43 = arith.cmpi eq, %42, %40 : vector<8x256xi32>
    %44 = arith.extui %43 : vector<8x256xi1> to vector<8x256xi32>
    %45 = arith.sitofp %44 : vector<8x256xi32> to vector<8x256xf32>
    %c0_22 = arith.constant 0 : index
    %c0_23 = arith.constant 0 : index
    %46 = vector.load %arg10[%c0_22, %c0_23] : memref<8x128xf32, #tpu.memory_space<vmem>>, vector<8x128xf32>
    %cst_24 = arith.constant dense<0.000000e+00> : vector<8x128xf32>
    %47 = tpu.matmul %45, %39, %cst_24 {dimension_numbers = #tpu.dot_dimension_numbers<[1], [0], [0], [1], [0, 0, 1, 1], [], []>} : vector<8x256xf32>, vector<256x128xf32>, vector<8x128xf32> -> vector<8x128xf32>
    %48 = arith.addf %46, %47 : vector<8x128xf32>
    %c0_25 = arith.constant 0 : index
    %c0_26 = arith.constant 0 : index
    %49 = vector.load %arg10[%c0_25, %c0_26] : memref<8x128xf32, #tpu.memory_space<vmem>>, vector<8x128xf32>
    tpu.vector_store %arg10[%c0_25, %c0_26], %48 {strides = array<i32>} : memref<8x128xf32, #tpu.memory_space<vmem>>, vector<8x128xf32>,
    return
  }
  func.func @transform_0(%arg0: i32, %arg1: i32) -> (i32, i32) {
    %c0_i32 = arith.constant 0 : i32
    %c0_i32_0 = arith.constant 0 : i32
    return %arg1, %c0_i32 : i32, i32
  }
  func.func @transform_1(%arg0: i32, %arg1: i32) -> (i32, i32) {
    %c0_i32 = arith.constant 0 : i32
    %c0_i32_0 = arith.constant 0 : i32
    return %c0_i32, %arg1 : i32, i32
  }
  func.func @transform_2(%arg0: i32, %arg1: i32) -> (i32, i32) {
    %c0_i32 = arith.constant 0 : i32
    %c0_i32_0 = arith.constant 0 : i32
    %c0_i32_1 = arith.constant 0 : i32
    return %c0_i32, %c0_i32_0 : i32, i32
  }
  func.func @transform_3(%arg0: i32, %arg1: i32) -> (i32, i32) {
    %c0_i32 = arith.constant 0 : i32
    %c0_i32_0 = arith.constant 0 : i32
    %c0_i32_1 = arith.constant 0 : i32
    return %c0_i32, %c0_i32_0 : i32, i32
  }
  func.func @transform_4(%arg0: i32, %arg1: i32) -> (i32, i32) {
    %c0_i32 = arith.constant 0 : i32
    %c0_i32_0 = arith.constant 0 : i32
    %c0_i32_1 = arith.constant 0 : i32
    return %c0_i32, %c0_i32_0 : i32, i32
  }
  func.func @transform_5(%arg0: i32, %arg1: i32) -> (i32, i32) {
    %c0_i32 = arith.constant 0 : i32
    %c0_i32_0 = arith.constant 0 : i32
    return %c0_i32, %arg0 : i32, i32
  }
  func.func @transform_6(%arg0: i32, %arg1: i32) -> (i32, i32) {
    %c0_i32 = arith.constant 0 : i32
    %c0_i32_0 = arith.constant 0 : i32
    return %c0_i32, %arg0 : i32, i32
  }
  func.func @transform_7(%arg0: i32, %arg1: i32) -> (i32, i32) {
    %c0_i32 = arith.constant 0 : i32
    return %arg1, %arg0 : i32, i32
  }
  func.func @transform_8(%arg0: i32, %arg1: i32) -> (i32, i32) {
    %c0_i32 = arith.constant 0 : i32
    %c0_i32_0 = arith.constant 0 : i32
    return %c0_i32, %arg0 : i32, i32
  }
}

</mosaic_0001>

<llo_original>
// kernel: tpu_custom_call.1
$region0: #{tpu_custom_call.1}
  #allocation0 [shape = 'u32[]', space=smem, size = 0x4, offset = 0x4, fixed_abs, tag = 'smem constant byte address 0x4 - core index']
  #allocation1 [shape = 'u32[144,128]{1,0:T(1,128)}', space=vmem, size = 0x12000, scoped, tag = 'internal scratch']
  %s0 = inlined_call_operand.vmem [shape: f32[256,1], index: 0, kind: input, shape index: {}]
  %s1 = inlined_call_operand.vmem [shape: s32[1,256], index: 1, kind: input, shape index: {}]
  %s2 = inlined_call_operand.vmem [shape: f32[1,128], index: 2, kind: input, shape index: {}]
  %s3 = inlined_call_operand.hbm [shape: f32[128,128], index: 3, kind: input, shape index: {}]
  %s4 = inlined_call_operand.vmem [shape: f32[1,128], index: 4, kind: input, shape index: {}]
  %s5 = inlined_call_operand.hbm [shape: f32[128,128], index: 5, kind: input, shape index: {}]
  %s6 = inlined_call_operand.vmem [shape: f32[1,128], index: 6, kind: input, shape index: {}]
  %s7 = inlined_call_operand.vmem [shape: f32[256,128], index: 7, kind: input, shape index: {}]
  %s8 = inlined_call_operand.hbm [shape: f32[8,128], index: 8, kind: output, shape index: {}]
  %s9 = sld [smem:[#allocation0]]
  $region54: #{tpu_custom_call.1} parent=0
    _
  %s11 = ssub.s32 1, %s9
  %s12 = scalar_select 0, %s11, %s9
  $region1: #{tpu_custom_call.1} parent=0
    #allocation2 [shape = 'u8[65536]{0}', space=vmem, size = 0x10000, scoped, tag = 'input window, operand 3, single buffered']
    #allocation3 [shape = 's32[1]{0}', space=sflag, size = 0x4, scoped, tag = 'scoped memory for tpu_custom_call.1']
    #allocation4 [shape = 's32[1]{0}', space=sflag, size = 0x4, scoped, tag = 'scoped memory for tpu_custom_call.1']
    #allocation5 [shape = 'u8[65536]{0}', space=vmem, size = 0x10000, scoped, tag = 'input window, operand 5, single buffered']
    #allocation6 [shape = 's32[1]{0}', space=sflag, size = 0x4, scoped, tag = 'scoped memory for tpu_custom_call.1']
    #allocation7 [shape = 'u8[4096]{0}', space=vmem, size = 0x1000, scoped, tag = 'output window, operand 0, single buffered']
    %13 = vsyncpa [#allocation3], 0
    %14 = vsyncpa [#allocation6], 0
    %15 = vsyncpa [#allocation4], 0
    // Predicated region
    $region2: #{tpu_custom_call.1} parent=1 // pred_check
      _
    $region3: #{tpu_custom_call.1} parent=1 // pred_check_branch
      %17 = sbr.rel (0) target = $region5
    $region4: #{tpu_custom_call.1} parent=1 // pred_region
      _
    $region5: #{tpu_custom_call.1} parent=1 // pred_fallthru
      _
    // Predicated region
    $region6: #{tpu_custom_call.1} parent=1 // pred_check
      _
    $region7: #{tpu_custom_call.1} parent=1 // pred_check_branch
      %19 = sbr.rel (0) target = $region9
    $region8: #{tpu_custom_call.1} parent=1 // pred_region
      _
    $region9: #{tpu_custom_call.1} parent=1 // pred_fallthru
      _
    // Predicated region
    $region10: #{tpu_custom_call.1} parent=1 // pred_check
      _
    $region11: #{tpu_custom_call.1} parent=1 // pred_check_branch
      %21 = sbr.rel (0) target = $region13
    $region12: #{tpu_custom_call.1} parent=1 // pred_region
      _
    $region13: #{tpu_custom_call.1} parent=1 // pred_fallthru
      _
    // Predicated region
    $region14: #{tpu_custom_call.1} parent=1 // pred_check
      _
    $region15: #{tpu_custom_call.1} parent=1 // pred_check_branch
      %23 = sbr.rel (0) target = $region17
    $region16: #{tpu_custom_call.1} parent=1 // pred_region
      %s25 = ssub.s32 2048, 2048
      %26 = vsyncadd [#allocation3], %s25
      %s27 = sshll.u32 [#allocation2], 4
      %s28 = int_to_ptr.vmem [resolvable:$true] %s27
      %33 = dma.hbm_to_vmem [thread:$0]  %s3, 2048, %s28, [#allocation3], 128, 128, 8
    $region17: #{tpu_custom_call.1} parent=1 // pred_fallthru
      _
    // Predicated region
    $region18: #{tpu_custom_call.1} parent=1 // pred_check
      _
    $region19: #{tpu_custom_call.1} parent=1 // pred_check_branch
      %35 = sbr.rel (0) target = $region21
    $region20: #{tpu_custom_call.1} parent=1 // pred_region
      _
    $region21: #{tpu_custom_call.1} parent=1 // pred_fallthru
      _
    // Predicated region
    $region22: #{tpu_custom_call.1} parent=1 // pred_check
      _
    $region23: #{tpu_custom_call.1} parent=1 // pred_check_branch
      %37 = sbr.rel (0) target = $region25
    $region24: #{tpu_custom_call.1} parent=1 // pred_region
      %s39 = ssub.s32 2048, 2048
      %40 = vsyncadd [#allocation6], %s39
      %s41 = sshll.u32 [#allocation5], 4
      %s42 = int_to_ptr.vmem [resolvable:$true] %s41
      %47 = dma.hbm_to_vmem [thread:$0]  %s5, 2048, %s42, [#allocation6], 128, 128, 8
    $region25: #{tpu_custom_call.1} parent=1 // pred_fallthru
      _
    // Predicated region
    $region26: #{tpu_custom_call.1} parent=1 // pred_check
      _
    $region27: #{tpu_custom_call.1} parent=1 // pred_check_branch
      %49 = sbr.rel (0) target = $region29
    $region28: #{tpu_custom_call.1} parent=1 // pred_region
      _
    $region29: #{tpu_custom_call.1} parent=1 // pred_fallthru
      _
    // Predicated region
    $region30: #{tpu_custom_call.1} parent=1 // pred_check
      _
    $region31: #{tpu_custom_call.1} parent=1 // pred_check_branch
      %51 = sbr.rel (0) target = $region33
    $region32: #{tpu_custom_call.1} parent=1 // pred_region
      _
    $region33: #{tpu_custom_call.1} parent=1 // pred_fallthru
      _
    // Predicated region
    $region34: #{tpu_custom_call.1} parent=1 // pred_check
      _
    $region35: #{tpu_custom_call.1} parent=1 // pred_check_branch
      %53 = sbr.rel (0) target = $region37
    $region36: #{tpu_custom_call.1} parent=1 // pred_region
      %54 = dma.done [#allocation3], 2048
    $region37: #{tpu_custom_call.1} parent=1 // pred_fallthru
      _
    // Predicated region
    $region38: #{tpu_custom_call.1} parent=1 // pred_check
      _
    $region39: #{tpu_custom_call.1} parent=1 // pred_check_branch
      %56 = sbr.rel (0) target = $region41
    $region40: #{tpu_custom_call.1} parent=1 // pred_region
      %57 = dma.done [#allocation6], 2048
    $region41: #{tpu_custom_call.1} parent=1 // pred_fallthru
      _
    %p58 = scmp.eq.s32.totalorder 0, 0
    // Predicated region
    $region42: #{tpu_custom_call.1} parent=1 // pred_check
      %p59 = pneg %p58
    $region43: #{tpu_custom_call.1} parent=1 // pred_check_branch
      %61 = sbr.rel (%p59) target = $region45
    $region44: #{tpu_custom_call.1} parent=1 // pred_region
      %62 = vst [vmem:[#allocation7] sm:$0xff] 0.0
    $region45: #{tpu_custom_call.1} parent=1 // pred_fallthru
      _
    %v63 = vld [vmem:[%s0] sm:$0xff]
    %v64 = vld [vmem:[%s0 + $0x8] sm:$0xff]
    %v65 = vld [vmem:[%s0 + $0x10] sm:$0xff]
    %v66 = vld [vmem:[%s0 + $0x18] sm:$0xff]
    %v67 = vld [vmem:[%s0 + $0x20] sm:$0xff]
    %v68 = vld [vmem:[%s0 + $0x28] sm:$0xff]
    %v69 = vld [vmem:[%s0 + $0x30] sm:$0xff]
    %v70 = vld [vmem:[%s0 + $0x38] sm:$0xff]
    %v71 = vld [vmem:[%s0 + $0x40] sm:$0xff]
    %v72 = vld [vmem:[%s0 + $0x48] sm:$0xff]
    %v73 = vld [vmem:[%s0 + $0x50] sm:$0xff]
    %v74 = vld [vmem:[%s0 + $0x58] sm:$0xff]
    %v75 = vld [vmem:[%s0 + $0x60] sm:$0xff]
    %v76 = vld [vmem:[%s0 + $0x68] sm:$0xff]
    %v77 = vld [vmem:[%s0 + $0x70] sm:$0xff]
    %v78 = vld [vmem:[%s0 + $0x78] sm:$0xff]
    %v79 = vld [vmem:[%s0 + $0x80] sm:$0xff]
    %v80 = vld [vmem:[%s0 + $0x88] sm:$0xff]
    %v81 = vld [vmem:[%s0 + $0x90] sm:$0xff]
    %v82 = vld [vmem:[%s0 + $0x98] sm:$0xff]
    %v83 = vld [vmem:[%s0 + $0xa0] sm:$0xff]
    %v84 = vld [vmem:[%s0 + $0xa8] sm:$0xff]
    %v85 = vld [vmem:[%s0 + $0xb0] sm:$0xff]
    %v86 = vld [vmem:[%s0 + $0xb8] sm:$0xff]
    %v87 = vld [vmem:[%s0 + $0xc0] sm:$0xff]
    %v88 = vld [vmem:[%s0 + $0xc8] sm:$0xff]
    %v89 = vld [vmem:[%s0 + $0xd0] sm:$0xff]
    %v90 = vld [vmem:[%s0 + $0xd8] sm:$0xff]
    %v91 = vld [vmem:[%s0 + $0xe0] sm:$0xff]
    %v92 = vld [vmem:[%s0 + $0xe8] sm:$0xff]
    %v93 = vld [vmem:[%s0 + $0xf0] sm:$0xff]
    %v94 = vld [vmem:[%s0 + $0xf8] sm:$0xff]
    %v95 = vld [vmem:[%s2] sm:$0x1]
    %97 = vset.pattern.permute.xlu0 0
    %98 = vperm.xlu0 %97, %v63
    %v99 = vpop.permute.xlu0 %98
    %102 = vset.pattern.permute.xlu0 0
    %103 = vperm.xlu0 %102, %v64
    %v104 = vpop.permute.xlu0 %103
    %107 = vset.pattern.permute.xlu0 0
    %108 = vperm.xlu0 %107, %v65
    %v109 = vpop.permute.xlu0 %108
    %112 = vset.pattern.permute.xlu0 0
    %113 = vperm.xlu0 %112, %v66
    %v114 = vpop.permute.xlu0 %113
    %117 = vset.pattern.permute.xlu0 0
    %118 = vperm.xlu0 %117, %v67
    %v119 = vpop.permute.xlu0 %118
    %122 = vset.pattern.permute.xlu0 0
    %123 = vperm.xlu0 %122, %v68
    %v124 = vpop.permute.xlu0 %123
    %127 = vset.pattern.permute.xlu0 0
    %128 = vperm.xlu0 %127, %v69
    %v129 = vpop.permute.xlu0 %128
    %132 = vset.pattern.permute.xlu0 0
    %133 = vperm.xlu0 %132, %v70
    %v134 = vpop.permute.xlu0 %133
    %137 = vset.pattern.permute.xlu0 0
    %138 = vperm.xlu0 %137, %v71
    %v139 = vpop.permute.xlu0 %138
    %142 = vset.pattern.permute.xlu0 0
    %143 = vperm.xlu0 %142, %v72
    %v144 = vpop.permute.xlu0 %143
    %147 = vset.pattern.permute.xlu0 0
    %148 = vperm.xlu0 %147, %v73
    %v149 = vpop.permute.xlu0 %148
    %152 = vset.pattern.permute.xlu0 0
    %153 = vperm.xlu0 %152, %v74
    %v154 = vpop.permute.xlu0 %153
    %157 = vset.pattern.permute.xlu0 0
    %158 = vperm.xlu0 %157, %v75
    %v159 = vpop.permute.xlu0 %158
    %162 = vset.pattern.permute.xlu0 0
    %163 = vperm.xlu0 %162, %v76
    %v164 = vpop.permute.xlu0 %163
    %167 = vset.pattern.permute.xlu0 0
    %168 = vperm.xlu0 %167, %v77
    %v169 = vpop.permute.xlu0 %168
    %172 = vset.pattern.permute.xlu0 0
    %173 = vperm.xlu0 %172, %v78
    %v174 = vpop.permute.xlu0 %173
    %177 = vset.pattern.permute.xlu0 0
    %178 = vperm.xlu0 %177, %v79
    %v179 = vpop.permute.xlu0 %178
    %182 = vset.pattern.permute.xlu0 0
    %183 = vperm.xlu0 %182, %v80
    %v184 = vpop.permute.xlu0 %183
    %187 = vset.pattern.permute.xlu0 0
    %188 = vperm.xlu0 %187, %v81
    %v189 = vpop.permute.xlu0 %188
    %192 = vset.pattern.permute.xlu0 0
    %193 = vperm.xlu0 %192, %v82
    %v194 = vpop.permute.xlu0 %193
    %197 = vset.pattern.permute.xlu0 0
    %198 = vperm.xlu0 %197, %v83
    %v199 = vpop.permute.xlu0 %198
    %202 = vset.pattern.permute.xlu0 0
    %203 = vperm.xlu0 %202, %v84
    %v204 = vpop.permute.xlu0 %203
    %207 = vset.pattern.permute.xlu0 0
    %208 = vperm.xlu0 %207, %v85
    %v209 = vpop.permute.xlu0 %208
    %212 = vset.pattern.permute.xlu0 0
    %213 = vperm.xlu0 %212, %v86
    %v214 = vpop.permute.xlu0 %213
    %217 = vset.pattern.permute.xlu0 0
    %218 = vperm.xlu0 %217, %v87
    %v219 = vpop.permute.xlu0 %218
    %222 = vset.pattern.permute.xlu0 0
    %223 = vperm.xlu0 %222, %v88
    %v224 = vpop.permute.xlu0 %223
    %227 = vset.pattern.permute.xlu0 0
    %228 = vperm.xlu0 %227, %v89
    %v229 = vpop.permute.xlu0 %228
    %232 = vset.pattern.permute.xlu0 0
    %233 = vperm.xlu0 %232, %v90
    %v234 = vpop.permute.xlu0 %233
    %237 = vset.pattern.permute.xlu0 0
    %238 = vperm.xlu0 %237, %v91
    %v239 = vpop.permute.xlu0 %238
    %242 = vset.pattern.permute.xlu0 0
    %243 = vperm.xlu0 %242, %v92
    %v244 = vpop.permute.xlu0 %243
    %247 = vset.pattern.permute.xlu0 0
    %248 = vperm.xlu0 %247, %v93
    %v249 = vpop.permute.xlu0 %248
    %252 = vset.pattern.permute.xlu0 0
    %253 = vperm.xlu0 %252, %v94
    %v254 = vpop.permute.xlu0 %253
    %v257 = vlaneseq
    %v258 = vshrl.u32 %v257, 7
    %v259 = vsub.s32 0, %v258
    %v260 = vrot.slane %v95, %v259
    %v262 = vsub.f32 %v99, %v260
    %v263 = vsub.f32 %v104, %v260
    %v264 = vsub.f32 %v109, %v260
    %v265 = vsub.f32 %v114, %v260
    %v266 = vsub.f32 %v119, %v260
    %v267 = vsub.f32 %v124, %v260
    %v268 = vsub.f32 %v129, %v260
    %v269 = vsub.f32 %v134, %v260
    %v270 = vsub.f32 %v139, %v260
    %v271 = vsub.f32 %v144, %v260
    %v272 = vsub.f32 %v149, %v260
    %v273 = vsub.f32 %v154, %v260
    %v274 = vsub.f32 %v159, %v260
    %v275 = vsub.f32 %v164, %v260
    %v276 = vsub.f32 %v169, %v260
    %v277 = vsub.f32 %v174, %v260
    %v278 = vsub.f32 %v179, %v260
    %v279 = vsub.f32 %v184, %v260
    %v280 = vsub.f32 %v189, %v260
    %v281 = vsub.f32 %v194, %v260
    %v282 = vsub.f32 %v199, %v260
    %v283 = vsub.f32 %v204, %v260
    %v284 = vsub.f32 %v209, %v260
    %v285 = vsub.f32 %v214, %v260
    %v286 = vsub.f32 %v219, %v260
    %v287 = vsub.f32 %v224, %v260
    %v288 = vsub.f32 %v229, %v260
    %v289 = vsub.f32 %v234, %v260
    %v290 = vsub.f32 %v239, %v260
    %v291 = vsub.f32 %v244, %v260
    %v292 = vsub.f32 %v249, %v260
    %v293 = vsub.f32 %v254, %v260
    %v294 = vmul.f32 %v262, -10.0
    %v295 = vmul.f32 %v263, -10.0
    %v296 = vmul.f32 %v264, -10.0
    %v297 = vmul.f32 %v265, -10.0
    %v298 = vmul.f32 %v266, -10.0
    %v299 = vmul.f32 %v267, -10.0
    %v300 = vmul.f32 %v268, -10.0
    %v301 = vmul.f32 %v269, -10.0
    %v302 = vmul.f32 %v270, -10.0
    %v303 = vmul.f32 %v271, -10.0
    %v304 = vmul.f32 %v272, -10.0
    %v305 = vmul.f32 %v273, -10.0
    %v306 = vmul.f32 %v274, -10.0
    %v307 = vmul.f32 %v275, -10.0
    %v308 = vmul.f32 %v276, -10.0
    %v309 = vmul.f32 %v277, -10.0
    %v310 = vmul.f32 %v278, -10.0
    %v311 = vmul.f32 %v279, -10.0
    %v312 = vmul.f32 %v280, -10.0
    %v313 = vmul.f32 %v281, -10.0
    %v314 = vmul.f32 %v282, -10.0
    %v315 = vmul.f32 %v283, -10.0
    %v316 = vmul.f32 %v284, -10.0
    %v317 = vmul.f32 %v285, -10.0
    %v318 = vmul.f32 %v286, -10.0
    %v319 = vmul.f32 %v287, -10.0
    %v320 = vmul.f32 %v288, -10.0
    %v321 = vmul.f32 %v289, -10.0
    %v322 = vmul.f32 %v290, -10.0
    %v323 = vmul.f32 %v291, -10.0
    %v324 = vmul.f32 %v292, -10.0
    %v325 = vmul.f32 %v293, -10.0
    %v326 = vmul.f32 %v294, %v262
    %v327 = vmul.f32 %v295, %v263
    %v328 = vmul.f32 %v296, %v264
    %v329 = vmul.f32 %v297, %v265
    %v330 = vmul.f32 %v298, %v266
    %v331 = vmul.f32 %v299, %v267
    %v332 = vmul.f32 %v300, %v268
    %v333 = vmul.f32 %v301, %v269
    %v334 = vmul.f32 %v302, %v270
    %v335 = vmul.f32 %v303, %v271
    %v336 = vmul.f32 %v304, %v272
    %v337 = vmul.f32 %v305, %v273
    %v338 = vmul.f32 %v306, %v274
    %v339 = vmul.f32 %v307, %v275
    %v340 = vmul.f32 %v308, %v276
    %v341 = vmul.f32 %v309, %v277
    %v342 = vmul.f32 %v310, %v278
    %v343 = vmul.f32 %v311, %v279
    %v344 = vmul.f32 %v312, %v280
    %v345 = vmul.f32 %v313, %v281
    %v346 = vmul.f32 %v314, %v282
    %v347 = vmul.f32 %v315, %v283
    %v348 = vmul.f32 %v316, %v284
    %v349 = vmul.f32 %v317, %v285
    %v350 = vmul.f32 %v318, %v286
    %v351 = vmul.f32 %v319, %v287
    %v352 = vmul.f32 %v320, %v288
    %v353 = vmul.f32 %v321, %v289
    %v354 = vmul.f32 %v322, %v290
    %v355 = vmul.f32 %v323, %v291
    %v356 = vmul.f32 %v324, %v292
    %v357 = vmul.f32 %v325, %v293
    %v358 = vmul.f32 %v326, 1.442695
    %v359 = vpow.pop %v358
    %v360 = vmul.f32 %v327, 1.442695
    %v361 = vpow.pop %v360
    %v362 = vmul.f32 %v328, 1.442695
    %v363 = vpow.pop %v362
    %v364 = vmul.f32 %v329, 1.442695
    %v365 = vpow.pop %v364
    %v366 = vmul.f32 %v330, 1.442695
    %v367 = vpow.pop %v366
    %v368 = vmul.f32 %v331, 1.442695
    %v369 = vpow.pop %v368
    %v370 = vmul.f32 %v332, 1.442695
    %v371 = vpow.pop %v370
    %v372 = vmul.f32 %v333, 1.442695
    %v373 = vpow.pop %v372
    %v374 = vmul.f32 %v334, 1.442695
    %v375 = vpow.pop %v374
    %v376 = vmul.f32 %v335, 1.442695
    %v377 = vpow.pop %v376
    %v378 = vmul.f32 %v336, 1.442695
    %v379 = vpow.pop %v378
    %v380 = vmul.f32 %v337, 1.442695
    %v381 = vpow.pop %v380
    %v382 = vmul.f32 %v338, 1.442695
    %v383 = vpow.pop %v382
    %v384 = vmul.f32 %v339, 1.442695
    %v385 = vpow.pop %v384
    %v386 = vmul.f32 %v340, 1.442695
    %v387 = vpow.pop %v386
    %v388 = vmul.f32 %v341, 1.442695
    %v389 = vpow.pop %v388
    %v390 = vmul.f32 %v342, 1.442695
    %v391 = vpow.pop %v390
    %v392 = vmul.f32 %v343, 1.442695
    %v393 = vpow.pop %v392
    %v394 = vmul.f32 %v344, 1.442695
    %v395 = vpow.pop %v394
    %v396 = vmul.f32 %v345, 1.442695
    %v397 = vpow.pop %v396
    %v398 = vmul.f32 %v346, 1.442695
    %v399 = vpow.pop %v398
    %v400 = vmul.f32 %v347, 1.442695
    %v401 = vpow.pop %v400
    %v402 = vmul.f32 %v348, 1.442695
    %v403 = vpow.pop %v402
    %v404 = vmul.f32 %v349, 1.442695
    %v405 = vpow.pop %v404
    %v406 = vmul.f32 %v350, 1.442695
    %v407 = vpow.pop %v406
    %v408 = vmul.f32 %v351, 1.442695
    %v409 = vpow.pop %v408
    %v410 = vmul.f32 %v352, 1.442695
    %v411 = vpow.pop %v410
    %v412 = vmul.f32 %v353, 1.442695
    %v413 = vpow.pop %v412
    %v414 = vmul.f32 %v354, 1.442695
    %v415 = vpow.pop %v414
    %v416 = vmul.f32 %v355, 1.442695
    %v417 = vpow.pop %v416
    %v418 = vmul.f32 %v356, 1.442695
    %v419 = vpow.pop %v418
    %v420 = vmul.f32 %v357, 1.442695
    %v421 = vpow.pop %v420
    %v422 = vld [vmem:[#allocation2] sm:$0xff]
    %v423 = vld [vmem:[#allocation2 + $0x8] sm:$0xff]
    %v424 = vld [vmem:[#allocation2 + $0x10] sm:$0xff]
    %v425 = vld [vmem:[#allocation2 + $0x18] sm:$0xff]
    %v426 = vld [vmem:[#allocation2 + $0x20] sm:$0xff]
    %v427 = vld [vmem:[#allocation2 + $0x28] sm:$0xff]
    %v428 = vld [vmem:[#allocation2 + $0x30] sm:$0xff]
    %v429 = vld [vmem:[#allocation2 + $0x38] sm:$0xff]
    %v430 = vld [vmem:[#allocation2 + $0x40] sm:$0xff]
    %v431 = vld [vmem:[#allocation2 + $0x48] sm:$0xff]
    %v432 = vld [vmem:[#allocation2 + $0x50] sm:$0xff]
    %v433 = vld [vmem:[#allocation2 + $0x58] sm:$0xff]
    %v434 = vld [vmem:[#allocation2 + $0x60] sm:$0xff]
    %v435 = vld [vmem:[#allocation2 + $0x68] sm:$0xff]
    %v436 = vld [vmem:[#allocation2 + $0x70] sm:$0xff]
    %v437 = vld [vmem:[#allocation2 + $0x78] sm:$0xff]
    %v438 = vld [vmem:[%s4] sm:$0x1]
    %v440 = vlaneseq
    %v441 = vshrl.u32 %v440, 7
    %v442 = vsub.s32 0, %v441
    %v443 = vrot.slane %v438, %v442
    %445 = vmatprep.subr.mxu0 0.0
    %446 = vmatpush1.msra.mxu0 %v422
    %447 = vmatprep.subr.mxu0 0.0
    %448 = vmatpush1.msra.mxu0 %v423
    %449 = vmatprep.subr.mxu0 0.0
    %450 = vmatpush1.msra.mxu0 %v424
    %451 = vmatprep.subr.mxu0 0.0
    %452 = vmatpush1.msra.mxu0 %v425
    %453 = vmatprep.subr.mxu0 0.0
    %454 = vmatpush1.msra.mxu0 %v426
    %455 = vmatprep.subr.mxu0 0.0
    %456 = vmatpush1.msra.mxu0 %v427
    %457 = vmatprep.subr.mxu0 0.0
    %458 = vmatpush1.msra.mxu0 %v428
    %459 = vmatprep.subr.mxu0 0.0
    %460 = vmatpush1.msra.mxu0 %v429
    %461 = vmatprep.subr.mxu0 0.0
    %462 = vmatpush1.msra.mxu0 %v430
    %463 = vmatprep.subr.mxu0 0.0
    %464 = vmatpush1.msra.mxu0 %v431
    %465 = vmatprep.subr.mxu0 0.0
    %466 = vmatpush1.msra.mxu0 %v432
    %467 = vmatprep.subr.mxu0 0.0
    %468 = vmatpush1.msra.mxu0 %v433
    %469 = vmatprep.subr.mxu0 0.0
    %470 = vmatpush1.msra.mxu0 %v434
    %471 = vmatprep.subr.mxu0 0.0
    %472 = vmatpush1.msra.mxu0 %v435
    %473 = vmatprep.subr.mxu0 0.0
    %474 = vmatpush1.msra.mxu0 %v436
    %475 = vmatprep.subr.mxu0 0.0
    %476 = vmatpush1.msra.mxu0 %v437
    %477 = vmatprep.subr.mxu0 0.0
    %478 = vmatpush1.msra.mxu0 0.0
    %479 = vmatprep.subr.mxu0 0.0
    %480 = vmatpush1.msra.mxu0 0.0
    %481 = vmatprep.subr.mxu0 0.0
    %482 = vmatpush1.msra.mxu0 0.0
    %483 = vmatprep.subr.mxu0 0.0
    %484 = vmatpush1.msra.mxu0 0.0
    %485 = vmatprep.subr.mxu0 0.0
    %486 = vmatpush1.msra.mxu0 0.0
    %487 = vmatprep.subr.mxu0 0.0
    %488 = vmatpush1.msra.mxu0 0.0
    %489 = vmatprep.subr.mxu0 0.0
    %490 = vmatpush1.msra.mxu0 0.0
    %491 = vmatprep.subr.mxu0 0.0
    %492 = vmatpush1.msra.mxu0 0.0
    %493 = vmatprep.subr.mxu0 0.0
    %494 = vmatpush1.msra.mxu0 0.0
    %495 = vmatprep.subr.mxu0 0.0
    %496 = vmatpush1.msra.mxu0 0.0
    %497 = vmatprep.subr.mxu0 0.0
    %498 = vmatpush1.msra.mxu0 0.0
    %499 = vmatprep.subr.mxu0 0.0
    %500 = vmatpush1.msra.mxu0 0.0
    %501 = vmatprep.subr.mxu0 0.0
    %502 = vmatpush1.msra.mxu0 0.0
    %503 = vmatprep.subr.mxu0 0.0
    %504 = vmatpush1.msra.mxu0 0.0
    %505 = vmatprep.subr.mxu0 0.0
    %506 = vmatpush1.msra.mxu0 0.0
    %507 = vmatprep.subr.mxu0 0.0
    %508 = vmatpush1.msra.mxu0 0.0
    %509 = vmatprep.mubr.f32.mxu0 0.0
    %510 = vmatmul.mubr.f32.gmra.mrb[0].mxu0 %v359
    %v511 = vpop.f32.mrb[0].mxu0
    %v512 = vadd.f32 %v443, %v511
    %v513 = vpop.f32.mrb[0].mxu0
    %514 = vmatprep.mubr.f32.mxu0 0.0
    %515 = vmatmul.mubr.f32.gmra.mrb[0].mxu0 %v361
    %v516 = vpop.f32.mrb[0].mxu0
    %v517 = vadd.f32 %v443, %v516
    %v518 = vpop.f32.mrb[0].mxu0
    %519 = vmatprep.mubr.f32.mxu0 0.0
    %520 = vmatmul.mubr.f32.gmra.mrb[0].mxu0 %v363
    %v521 = vpop.f32.mrb[0].mxu0
    %v522 = vadd.f32 %v443, %v521
    %v523 = vpop.f32.mrb[0].mxu0
    %524 = vmatprep.mubr.f32.mxu0 0.0
    %525 = vmatmul.mubr.f32.gmra.mrb[0].mxu0 %v365
    %v526 = vpop.f32.mrb[0].mxu0
    %v527 = vadd.f32 %v443, %v526
    %v528 = vpop.f32.mrb[0].mxu0
    %529 = vmatprep.mubr.f32.mxu0 0.0
    %530 = vmatmul.mubr.f32.gmra.mrb[0].mxu0 %v367
    %v531 = vpop.f32.mrb[0].mxu0
    %v532 = vadd.f32 %v443, %v531
    %v533 = vpop.f32.mrb[0].mxu0
    %534 = vmatprep.mubr.f32.mxu0 0.0
    %535 = vmatmul.mubr.f32.gmra.mrb[0].mxu0 %v369
    %v536 = vpop.f32.mrb[0].mxu0
    %v537 = vadd.f32 %v443, %v536
    %v538 = vpop.f32.mrb[0].mxu0
    %539 = vmatprep.mubr.f32.mxu0 0.0
    %540 = vmatmul.mubr.f32.gmra.mrb[0].mxu0 %v371
    %v541 = vpop.f32.mrb[0].mxu0
    %v542 = vadd.f32 %v443, %v541
    %v543 = vpop.f32.mrb[0].mxu0
    %544 = vmatprep.mubr.f32.mxu0 0.0
    %545 = vmatmul.mubr.f32.gmra.mrb[0].mxu0 %v373
    %v546 = vpop.f32.mrb[0].mxu0
    %v547 = vadd.f32 %v443, %v546
    %v548 = vpop.f32.mrb[0].mxu0
    %549 = vmatprep.mubr.f32.mxu0 0.0
    %550 = vmatmul.mubr.f32.gmra.mrb[0].mxu0 %v375
    %v551 = vpop.f32.mrb[0].mxu0
    %v552 = vadd.f32 %v443, %v551
    %v553 = vpop.f32.mrb[0].mxu0
    %554 = vmatprep.mubr.f32.mxu0 0.0
    %555 = vmatmul.mubr.f32.gmra.mrb[0].mxu0 %v377
    %v556 = vpop.f32.mrb[0].mxu0
    %v557 = vadd.f32 %v443, %v556
    %v558 = vpop.f32.mrb[0].mxu0
    %559 = vmatprep.mubr.f32.mxu0 0.0
    %560 = vmatmul.mubr.f32.gmra.mrb[0].mxu0 %v379
    %v561 = vpop.f32.mrb[0].mxu0
    %v562 = vadd.f32 %v443, %v561
    %v563 = vpop.f32.mrb[0].mxu0
    %564 = vmatprep.mubr.f32.mxu0 0.0
    %565 = vmatmul.mubr.f32.gmra.mrb[0].mxu0 %v381
    %v566 = vpop.f32.mrb[0].mxu0
    %v567 = vadd.f32 %v443, %v566
    %v568 = vpop.f32.mrb[0].mxu0
    %569 = vmatprep.mubr.f32.mxu0 0.0
    %570 = vmatmul.mubr.f32.gmra.mrb[0].mxu0 %v383
    %v571 = vpop.f32.mrb[0].mxu0
    %v572 = vadd.f32 %v443, %v571
    %v573 = vpop.f32.mrb[0].mxu0
    %574 = vmatprep.mubr.f32.mxu0 0.0
    %575 = vmatmul.mubr.f32.gmra.mrb[0].mxu0 %v385
    %v576 = vpop.f32.mrb[0].mxu0
    %v577 = vadd.f32 %v443, %v576
    %v578 = vpop.f32.mrb[0].mxu0
    %579 = vmatprep.mubr.f32.mxu0 0.0
    %580 = vmatmul.mubr.f32.gmra.mrb[0].mxu0 %v387
    %v581 = vpop.f32.mrb[0].mxu0
    %v582 = vadd.f32 %v443, %v581
    %v583 = vpop.f32.mrb[0].mxu0
    %584 = vmatprep.mubr.f32.mxu0 0.0
    %585 = vmatmul.mubr.f32.gmra.mrb[0].mxu0 %v389
    %v586 = vpop.f32.mrb[0].mxu0
    %v587 = vadd.f32 %v443, %v586
    %v588 = vpop.f32.mrb[0].mxu0
    %589 = vmatprep.mubr.f32.mxu0 0.0
    %590 = vmatmul.mubr.f32.gmra.mrb[0].mxu0 %v391
    %v591 = vpop.f32.mrb[0].mxu0
    %v592 = vadd.f32 %v443, %v591
    %v593 = vpop.f32.mrb[0].mxu0
    %594 = vmatprep.mubr.f32.mxu0 0.0
    %595 = vmatmul.mubr.f32.gmra.mrb[0].mxu0 %v393
    %v596 = vpop.f32.mrb[0].mxu0
    %v597 = vadd.f32 %v443, %v596
    %v598 = vpop.f32.mrb[0].mxu0
    %599 = vmatprep.mubr.f32.mxu0 0.0
    %600 = vmatmul.mubr.f32.gmra.mrb[0].mxu0 %v395
    %v601 = vpop.f32.mrb[0].mxu0
    %v602 = vadd.f32 %v443, %v601
    %v603 = vpop.f32.mrb[0].mxu0
    %604 = vmatprep.mubr.f32.mxu0 0.0
    %605 = vmatmul.mubr.f32.gmra.mrb[0].mxu0 %v397
    %v606 = vpop.f32.mrb[0].mxu0
    %v607 = vadd.f32 %v443, %v606
    %v608 = vpop.f32.mrb[0].mxu0
    %609 = vmatprep.mubr.f32.mxu0 0.0
    %610 = vmatmul.mubr.f32.gmra.mrb[0].mxu0 %v399
    %v611 = vpop.f32.mrb[0].mxu0
    %v612 = vadd.f32 %v443, %v611
    %v613 = vpop.f32.mrb[0].mxu0
    %614 = vmatprep.mubr.f32.mxu0 0.0
    %615 = vmatmul.mubr.f32.gmra.mrb[0].mxu0 %v401
    %v616 = vpop.f32.mrb[0].mxu0
    %v617 = vadd.f32 %v443, %v616
    %v618 = vpop.f32.mrb[0].mxu0
    %619 = vmatprep.mubr.f32.mxu0 0.0
    %620 = vmatmul.mubr.f32.gmra.mrb[0].mxu0 %v403
    %v621 = vpop.f32.mrb[0].mxu0
    %v622 = vadd.f32 %v443, %v621
    %v623 = vpop.f32.mrb[0].mxu0
    %624 = vmatprep.mubr.f32.mxu0 0.0
    %625 = vmatmul.mubr.f32.gmra.mrb[0].mxu0 %v405
    %v626 = vpop.f32.mrb[0].mxu0
    %v627 = vadd.f32 %v443, %v626
    %v628 = vpop.f32.mrb[0].mxu0
    %629 = vmatprep.mubr.f32.mxu0 0.0
    %630 = vmatmul.mubr.f32.gmra.mrb[0].mxu0 %v407
    %v631 = vpop.f32.mrb[0].mxu0
    %v632 = vadd.f32 %v443, %v631
    %v633 = vpop.f32.mrb[0].mxu0
    %634 = vmatprep.mubr.f32.mxu0 0.0
    %635 = vmatmul.mubr.f32.gmra.mrb[0].mxu0 %v409
    %v636 = vpop.f32.mrb[0].mxu0
    %v637 = vadd.f32 %v443, %v636
    %v638 = vpop.f32.mrb[0].mxu0
    %639 = vmatprep.mubr.f32.mxu0 0.0
    %640 = vmatmul.mubr.f32.gmra.mrb[0].mxu0 %v411
    %v641 = vpop.f32.mrb[0].mxu0
    %v642 = vadd.f32 %v443, %v641
    %v643 = vpop.f32.mrb[0].mxu0
    %644 = vmatprep.mubr.f32.mxu0 0.0
    %645 = vmatmul.mubr.f32.gmra.mrb[0].mxu0 %v413
    %v646 = vpop.f32.mrb[0].mxu0
    %v647 = vadd.f32 %v443, %v646
    %v648 = vpop.f32.mrb[0].mxu0
    %649 = vmatprep.mubr.f32.mxu0 0.0
    %650 = vmatmul.mubr.f32.gmra.mrb[0].mxu0 %v415
    %v651 = vpop.f32.mrb[0].mxu0
    %v652 = vadd.f32 %v443, %v651
    %v653 = vpop.f32.mrb[0].mxu0
    %654 = vmatprep.mubr.f32.mxu0 0.0
    %655 = vmatmul.mubr.f32.gmra.mrb[0].mxu0 %v417
    %v656 = vpop.f32.mrb[0].mxu0
    %v657 = vadd.f32 %v443, %v656
    %v658 = vpop.f32.mrb[0].mxu0
    %659 = vmatprep.mubr.f32.mxu0 0.0
    %660 = vmatmul.mubr.f32.gmra.mrb[0].mxu0 %v419
    %v661 = vpop.f32.mrb[0].mxu0
    %v662 = vadd.f32 %v443, %v661
    %v663 = vpop.f32.mrb[0].mxu0
    %664 = vmatprep.mubr.f32.mxu0 0.0
    %665 = vmatmul.mubr.f32.gmra.mrb[0].mxu0 %v421
    %v666 = vpop.f32.mrb[0].mxu0
    %v667 = vadd.f32 %v443, %v666
    %v668 = vpop.f32.mrb[0].mxu0
    %669 = vdwg.mxu0
    %v670 = vmax.f32 %v512, 0.0
    %v671 = vmax.f32 %v517, 0.0
    %v672 = vmax.f32 %v522, 0.0
    %v673 = vmax.f32 %v527, 0.0
    %v674 = vmax.f32 %v532, 0.0
    %v675 = vmax.f32 %v537, 0.0
    %v676 = vmax.f32 %v542, 0.0
    %v677 = vmax.f32 %v547, 0.0
    %v678 = vmax.f32 %v552, 0.0
    %v679 = vmax.f32 %v557, 0.0
    %v680 = vmax.f32 %v562, 0.0
    %v681 = vmax.f32 %v567, 0.0
    %v682 = vmax.f32 %v572, 0.0
    %v683 = vmax.f32 %v577, 0.0
    %v684 = vmax.f32 %v582, 0.0
    %v685 = vmax.f32 %v587, 0.0
    %v686 = vmax.f32 %v592, 0.0
    %v687 = vmax.f32 %v597, 0.0
    %v688 = vmax.f32 %v602, 0.0
    %v689 = vmax.f32 %v607, 0.0
    %v690 = vmax.f32 %v612, 0.0
    %v691 = vmax.f32 %v617, 0.0
    %v692 = vmax.f32 %v622, 0.0
    %v693 = vmax.f32 %v627, 0.0
    %v694 = vmax.f32 %v632, 0.0
    %v695 = vmax.f32 %v637, 0.0
    %v696 = vmax.f32 %v642, 0.0
    %v697 = vmax.f32 %v647, 0.0
    %v698 = vmax.f32 %v652, 0.0
    %v699 = vmax.f32 %v657, 0.0
    %v700 = vmax.f32 %v662, 0.0
    %v701 = vmax.f32 %v667, 0.0
    %v702 = vand.u32 2147483647, %v512
    %v703 = vand.u32 2147483647, %v517
    %v704 = vand.u32 2147483647, %v522
    %v705 = vand.u32 2147483647, %v527
    %v706 = vand.u32 2147483647, %v532
    %v707 = vand.u32 2147483647, %v537
    %v708 = vand.u32 2147483647, %v542
    %v709 = vand.u32 2147483647, %v547
    %v710 = vand.u32 2147483647, %v552
    %v711 = vand.u32 2147483647, %v557
    %v712 = vand.u32 2147483647, %v562
    %v713 = vand.u32 2147483647, %v567
    %v714 = vand.u32 2147483647, %v572
    %v715 = vand.u32 2147483647, %v577
    %v716 = vand.u32 2147483647, %v582
    %v717 = vand.u32 2147483647, %v587
    %v718 = vand.u32 2147483647, %v592
    %v719 = vand.u32 2147483647, %v597
    %v720 = vand.u32 2147483647, %v602
    %v721 = vand.u32 2147483647, %v607
    %v722 = vand.u32 2147483647, %v612
    %v723 = vand.u32 2147483647, %v617
    %v724 = vand.u32 2147483647, %v622
    %v725 = vand.u32 2147483647, %v627
    %v726 = vand.u32 2147483647, %v632
    %v727 = vand.u32 2147483647, %v637
    %v728 = vand.u32 2147483647, %v642
    %v729 = vand.u32 2147483647, %v647
    %v730 = vand.u32 2147483647, %v652
    %v731 = vand.u32 2147483647, %v657
    %v732 = vand.u32 2147483647, %v662
    %v733 = vand.u32 2147483647, %v667
    %v734 = vsub.f32 0.0, %v702
    %v735 = vsub.f32 0.0, %v703
    %v736 = vsub.f32 0.0, %v704
    %v737 = vsub.f32 0.0, %v705
    %v738 = vsub.f32 0.0, %v706
    %v739 = vsub.f32 0.0, %v707
    %v740 = vsub.f32 0.0, %v708
    %v741 = vsub.f32 0.0, %v709
    %v742 = vsub.f32 0.0, %v710
    %v743 = vsub.f32 0.0, %v711
    %v744 = vsub.f32 0.0, %v712
    %v745 = vsub.f32 0.0, %v713
    %v746 = vsub.f32 0.0, %v714
    %v747 = vsub.f32 0.0, %v715
    %v748 = vsub.f32 0.0, %v716
    %v749 = vsub.f32 0.0, %v717
    %v750 = vsub.f32 0.0, %v718
    %v751 = vsub.f32 0.0, %v719
    %v752 = vsub.f32 0.0, %v720
    %v753 = vsub.f32 0.0, %v721
    %v754 = vsub.f32 0.0, %v722
    %v755 = vsub.f32 0.0, %v723
    %v756 = vsub.f32 0.0, %v724
    %v757 = vsub.f32 0.0, %v725
    %v758 = vsub.f32 0.0, %v726
    %v759 = vsub.f32 0.0, %v727
    %v760 = vsub.f32 0.0, %v728
    %v761 = vsub.f32 0.0, %v729
    %v762 = vsub.f32 0.0, %v730
    %v763 = vsub.f32 0.0, %v731
    %v764 = vsub.f32 0.0, %v732
    %v765 = vsub.f32 0.0, %v733
    %v766 = vmul.f32 %v734, 1.442695
    %v767 = vpow.pop %v766
    %v768 = vmul.f32 %v735, 1.442695
    %v769 = vpow.pop %v768
    %v770 = vmul.f32 %v736, 1.442695
    %v771 = vpow.pop %v770
    %v772 = vmul.f32 %v737, 1.442695
    %v773 = vpow.pop %v772
    %v774 = vmul.f32 %v738, 1.442695
    %v775 = vpow.pop %v774
    %v776 = vmul.f32 %v739, 1.442695
    %v777 = vpow.pop %v776
    %v778 = vmul.f32 %v740, 1.442695
    %v779 = vpow.pop %v778
    %v780 = vmul.f32 %v741, 1.442695
    %v781 = vpow.pop %v780
    %v782 = vmul.f32 %v742, 1.442695
    %v783 = vpow.pop %v782
    %v784 = vmul.f32 %v743, 1.442695
    %v785 = vpow.pop %v784
    %v786 = vmul.f32 %v744, 1.442695
    %v787 = vpow.pop %v786
    %v788 = vmul.f32 %v745, 1.442695
    %v789 = vpow.pop %v788
    %v790 = vmul.f32 %v746, 1.442695
    %v791 = vpow.pop %v790
    %v792 = vmul.f32 %v747, 1.442695
    %v793 = vpow.pop %v792
    %v794 = vmul.f32 %v748, 1.442695
    %v795 = vpow.pop %v794
    %v796 = vmul.f32 %v749, 1.442695
    %v797 = vpow.pop %v796
    %v798 = vmul.f32 %v750, 1.442695
    %v799 = vpow.pop %v798
    %v800 = vmul.f32 %v751, 1.442695
    %v801 = vpow.pop %v800
    %v802 = vmul.f32 %v752, 1.442695
    %v803 = vpow.pop %v802
    %v804 = vmul.f32 %v753, 1.442695
    %v805 = vpow.pop %v804
    %v806 = vmul.f32 %v754, 1.442695
    %v807 = vpow.pop %v806
    %v808 = vmul.f32 %v755, 1.442695
    %v809 = vpow.pop %v808
    %v810 = vmul.f32 %v756, 1.442695
    %v811 = vpow.pop %v810
    %v812 = vmul.f32 %v757, 1.442695
    %v813 = vpow.pop %v812
    %v814 = vmul.f32 %v758, 1.442695
    %v815 = vpow.pop %v814
    %v816 = vmul.f32 %v759, 1.442695
    %v817 = vpow.pop %v816
    %v818 = vmul.f32 %v760, 1.442695
    %v819 = vpow.pop %v818
    %v820 = vmul.f32 %v761, 1.442695
    %v821 = vpow.pop %v820
    %v822 = vmul.f32 %v762, 1.442695
    %v823 = vpow.pop %v822
    %v824 = vmul.f32 %v763, 1.442695
    %v825 = vpow.pop %v824
    %v826 = vmul.f32 %v764, 1.442695
    %v827 = vpow.pop %v826
    %v828 = vmul.f32 %v765, 1.442695
    %v829 = vpow.pop %v828
    %v830 = vadd.f32 %v767, 1.0
    %v831 = vlog2.pop %v830
    %v832 = vmul.f32 %v831, 0.6931472
    %v833 = vmul.f32 -0.5, %v767
    %v834 = vadd.f32 %v833, 1.0
    %v835 = vmul.f32 %v834, %v767
    %v836 = vand.u32 2147483647, %v767
    %vm837 = vcmp.lt.f32.partialorder %v836, 0.0004427343
    %v838 = vsel %vm837, %v835, %v832
    %v839 = vadd.f32 %v769, 1.0
    %v840 = vlog2.pop %v839
    %v841 = vmul.f32 %v840, 0.6931472
    %v842 = vmul.f32 -0.5, %v769
    %v843 = vadd.f32 %v842, 1.0
    %v844 = vmul.f32 %v843, %v769
    %v845 = vand.u32 2147483647, %v769
    %vm846 = vcmp.lt.f32.partialorder %v845, 0.0004427343
    %v847 = vsel %vm846, %v844, %v841
    %v848 = vadd.f32 %v771, 1.0
    %v849 = vlog2.pop %v848
    %v850 = vmul.f32 %v849, 0.6931472
    %v851 = vmul.f32 -0.5, %v771
    %v852 = vadd.f32 %v851, 1.0
    %v853 = vmul.f32 %v852, %v771
    %v854 = vand.u32 2147483647, %v771
    %vm855 = vcmp.lt.f32.partialorder %v854, 0.0004427343
    %v856 = vsel %vm855, %v853, %v850
    %v857 = vadd.f32 %v773, 1.0
    %v858 = vlog2.pop %v857
    %v859 = vmul.f32 %v858, 0.6931472
    %v860 = vmul.f32 -0.5, %v773
    %v861 = vadd.f32 %v860, 1.0
    %v862 = vmul.f32 %v861, %v773
    %v863 = vand.u32 2147483647, %v773
    %vm864 = vcmp.lt.f32.partialorder %v863, 0.0004427343
    %v865 = vsel %vm864, %v862, %v859
    %v866 = vadd.f32 %v775, 1.0
    %v867 = vlog2.pop %v866
    %v868 = vmul.f32 %v867, 0.6931472
    %v869 = vmul.f32 -0.5, %v775
    %v870 = vadd.f32 %v869, 1.0
    %v871 = vmul.f32 %v870, %v775
    %v872 = vand.u32 2147483647, %v775
    %vm873 = vcmp.lt.f32.partialorder %v872, 0.0004427343
    %v874 = vsel %vm873, %v871, %v868
    %v875 = vadd.f32 %v777, 1.0
    %v876 = vlog2.pop %v875
    %v877 = vmul.f32 %v876, 0.6931472
    %v878 = vmul.f32 -0.5, %v777
    %v879 = vadd.f32 %v878, 1.0
    %v880 = vmul.f32 %v879, %v777
    %v881 = vand.u32 2147483647, %v777
    %vm882 = vcmp.lt.f32.partialorder %v881, 0.0004427343
    %v883 = vsel %vm882, %v880, %v877
    %v884 = vadd.f32 %v779, 1.0
    %v885 = vlog2.pop %v884
    %v886 = vmul.f32 %v885, 0.6931472
    %v887 = vmul.f32 -0.5, %v779
    %v888 = vadd.f32 %v887, 1.0
    %v889 = vmul.f32 %v888, %v779
    %v890 = vand.u32 2147483647, %v779
    %vm891 = vcmp.lt.f32.partialorder %v890, 0.0004427343
    %v892 = vsel %vm891, %v889, %v886
    %v893 = vadd.f32 %v781, 1.0
    %v894 = vlog2.pop %v893
    %v895 = vmul.f32 %v894, 0.6931472
    %v896 = vmul.f32 -0.5, %v781
    %v897 = vadd.f32 %v896, 1.0
    %v898 = vmul.f32 %v897, %v781
    %v899 = vand.u32 2147483647, %v781
    %vm900 = vcmp.lt.f32.partialorder %v899, 0.0004427343
    %v901 = vsel %vm900, %v898, %v895
    %v902 = vadd.f32 %v783, 1.0
    %v903 = vlog2.pop %v902
    %v904 = vmul.f32 %v903, 0.6931472
    %v905 = vmul.f32 -0.5, %v783
    %v906 = vadd.f32 %v905, 1.0
    %v907 = vmul.f32 %v906, %v783
    %v908 = vand.u32 2147483647, %v783
    %vm909 = vcmp.lt.f32.partialorder %v908, 0.0004427343
    %v910 = vsel %vm909, %v907, %v904
    %v911 = vadd.f32 %v785, 1.0
    %v912 = vlog2.pop %v911
    %v913 = vmul.f32 %v912, 0.6931472
    %v914 = vmul.f32 -0.5, %v785
    %v915 = vadd.f32 %v914, 1.0
    %v916 = vmul.f32 %v915, %v785
    %v917 = vand.u32 2147483647, %v785
    %vm918 = vcmp.lt.f32.partialorder %v917, 0.0004427343
    %v919 = vsel %vm918, %v916, %v913
    %v920 = vadd.f32 %v787, 1.0
    %v921 = vlog2.pop %v920
    %v922 = vmul.f32 %v921, 0.6931472
    %v923 = vmul.f32 -0.5, %v787
    %v924 = vadd.f32 %v923, 1.0
    %v925 = vmul.f32 %v924, %v787
    %v926 = vand.u32 2147483647, %v787
    %vm927 = vcmp.lt.f32.partialorder %v926, 0.0004427343
    %v928 = vsel %vm927, %v925, %v922
    %v929 = vadd.f32 %v789, 1.0
    %v930 = vlog2.pop %v929
    %v931 = vmul.f32 %v930, 0.6931472
    %v932 = vmul.f32 -0.5, %v789
    %v933 = vadd.f32 %v932, 1.0
    %v934 = vmul.f32 %v933, %v789
    %v935 = vand.u32 2147483647, %v789
    %vm936 = vcmp.lt.f32.partialorder %v935, 0.0004427343
    %v937 = vsel %vm936, %v934, %v931
    %v938 = vadd.f32 %v791, 1.0
    %v939 = vlog2.pop %v938
    %v940 = vmul.f32 %v939, 0.6931472
    %v941 = vmul.f32 -0.5, %v791
    %v942 = vadd.f32 %v941, 1.0
    %v943 = vmul.f32 %v942, %v791
    %v944 = vand.u32 2147483647, %v791
    %vm945 = vcmp.lt.f32.partialorder %v944, 0.0004427343
    %v946 = vsel %vm945, %v943, %v940
    %v947 = vadd.f32 %v793, 1.0
    %v948 = vlog2.pop %v947
    %v949 = vmul.f32 %v948, 0.6931472
    %v950 = vmul.f32 -0.5, %v793
    %v951 = vadd.f32 %v950, 1.0
    %v952 = vmul.f32 %v951, %v793
    %v953 = vand.u32 2147483647, %v793
    %vm954 = vcmp.lt.f32.partialorder %v953, 0.0004427343
    %v955 = vsel %vm954, %v952, %v949
    %v956 = vadd.f32 %v795, 1.0
    %v957 = vlog2.pop %v956
    %v958 = vmul.f32 %v957, 0.6931472
    %v959 = vmul.f32 -0.5, %v795
    %v960 = vadd.f32 %v959, 1.0
    %v961 = vmul.f32 %v960, %v795
    %v962 = vand.u32 2147483647, %v795
    %vm963 = vcmp.lt.f32.partialorder %v962, 0.0004427343
    %v964 = vsel %vm963, %v961, %v958
    %v965 = vadd.f32 %v797, 1.0
    %v966 = vlog2.pop %v965
    %v967 = vmul.f32 %v966, 0.6931472
    %v968 = vmul.f32 -0.5, %v797
    %v969 = vadd.f32 %v968, 1.0
    %v970 = vmul.f32 %v969, %v797
    %v971 = vand.u32 2147483647, %v797
    %vm972 = vcmp.lt.f32.partialorder %v971, 0.0004427343
    %v973 = vsel %vm972, %v970, %v967
    %v974 = vadd.f32 %v799, 1.0
    %v975 = vlog2.pop %v974
    %v976 = vmul.f32 %v975, 0.6931472
    %v977 = vmul.f32 -0.5, %v799
    %v978 = vadd.f32 %v977, 1.0
    %v979 = vmul.f32 %v978, %v799
    %v980 = vand.u32 2147483647, %v799
    %vm981 = vcmp.lt.f32.partialorder %v980, 0.0004427343
    %v982 = vsel %vm981, %v979, %v976
    %v983 = vadd.f32 %v801, 1.0
    %v984 = vlog2.pop %v983
    %v985 = vmul.f32 %v984, 0.6931472
    %v986 = vmul.f32 -0.5, %v801
    %v987 = vadd.f32 %v986, 1.0
    %v988 = vmul.f32 %v987, %v801
    %v989 = vand.u32 2147483647, %v801
    %vm990 = vcmp.lt.f32.partialorder %v989, 0.0004427343
    %v991 = vsel %vm990, %v988, %v985
    %v992 = vadd.f32 %v803, 1.0
    %v993 = vlog2.pop %v992
    %v994 = vmul.f32 %v993, 0.6931472
    %v995 = vmul.f32 -0.5, %v803
    %v996 = vadd.f32 %v995, 1.0
    %v997 = vmul.f32 %v996, %v803
    %v998 = vand.u32 2147483647, %v803
    %vm999 = vcmp.lt.f32.partialorder %v998, 0.0004427343
    %v1000 = vsel %vm999, %v997, %v994
    %v1001 = vadd.f32 %v805, 1.0
    %v1002 = vlog2.pop %v1001
    %v1003 = vmul.f32 %v1002, 0.6931472
    %v1004 = vmul.f32 -0.5, %v805
    %v1005 = vadd.f32 %v1004, 1.0
    %v1006 = vmul.f32 %v1005, %v805
    %v1007 = vand.u32 2147483647, %v805
    %vm1008 = vcmp.lt.f32.partialorder %v1007, 0.0004427343
    %v1009 = vsel %vm1008, %v1006, %v1003
    %v1010 = vadd.f32 %v807, 1.0
    %v1011 = vlog2.pop %v1010
    %v1012 = vmul.f32 %v1011, 0.6931472
    %v1013 = vmul.f32 -0.5, %v807
    %v1014 = vadd.f32 %v1013, 1.0
    %v1015 = vmul.f32 %v1014, %v807
    %v1016 = vand.u32 2147483647, %v807
    %vm1017 = vcmp.lt.f32.partialorder %v1016, 0.0004427343
    %v1018 = vsel %vm1017, %v1015, %v1012
    %v1019 = vadd.f32 %v809, 1.0
    %v1020 = vlog2.pop %v1019
    %v1021 = vmul.f32 %v1020, 0.6931472
    %v1022 = vmul.f32 -0.5, %v809
    %v1023 = vadd.f32 %v1022, 1.0
    %v1024 = vmul.f32 %v1023, %v809
    %v1025 = vand.u32 2147483647, %v809
    %vm1026 = vcmp.lt.f32.partialorder %v1025, 0.0004427343
    %v1027 = vsel %vm1026, %v1024, %v1021
    %v1028 = vadd.f32 %v811, 1.0
    %v1029 = vlog2.pop %v1028
    %v1030 = vmul.f32 %v1029, 0.6931472
    %v1031 = vmul.f32 -0.5, %v811
    %v1032 = vadd.f32 %v1031, 1.0
    %v1033 = vmul.f32 %v1032, %v811
    %v1034 = vand.u32 2147483647, %v811
    %vm1035 = vcmp.lt.f32.partialorder %v1034, 0.0004427343
    %v1036 = vsel %vm1035, %v1033, %v1030
    %v1037 = vadd.f32 %v813, 1.0
    %v1038 = vlog2.pop %v1037
    %v1039 = vmul.f32 %v1038, 0.6931472
    %v1040 = vmul.f32 -0.5, %v813
    %v1041 = vadd.f32 %v1040, 1.0
    %v1042 = vmul.f32 %v1041, %v813
    %v1043 = vand.u32 2147483647, %v813
    %vm1044 = vcmp.lt.f32.partialorder %v1043, 0.0004427343
    %v1045 = vsel %vm1044, %v1042, %v1039
    %v1046 = vadd.f32 %v815, 1.0
    %v1047 = vlog2.pop %v1046
    %v1048 = vmul.f32 %v1047, 0.6931472
    %v1049 = vmul.f32 -0.5, %v815
    %v1050 = vadd.f32 %v1049, 1.0
    %v1051 = vmul.f32 %v1050, %v815
    %v1052 = vand.u32 2147483647, %v815
    %vm1053 = vcmp.lt.f32.partialorder %v1052, 0.0004427343
    %v1054 = vsel %vm1053, %v1051, %v1048
    %v1055 = vadd.f32 %v817, 1.0
    %v1056 = vlog2.pop %v1055
    %v1057 = vmul.f32 %v1056, 0.6931472
    %v1058 = vmul.f32 -0.5, %v817
    %v1059 = vadd.f32 %v1058, 1.0
    %v1060 = vmul.f32 %v1059, %v817
    %v1061 = vand.u32 2147483647, %v817
    %vm1062 = vcmp.lt.f32.partialorder %v1061, 0.0004427343
    %v1063 = vsel %vm1062, %v1060, %v1057
    %v1064 = vadd.f32 %v819, 1.0
    %v1065 = vlog2.pop %v1064
    %v1066 = vmul.f32 %v1065, 0.6931472
    %v1067 = vmul.f32 -0.5, %v819
    %v1068 = vadd.f32 %v1067, 1.0
    %v1069 = vmul.f32 %v1068, %v819
    %v1070 = vand.u32 2147483647, %v819
    %vm1071 = vcmp.lt.f32.partialorder %v1070, 0.0004427343
    %v1072 = vsel %vm1071, %v1069, %v1066
    %v1073 = vadd.f32 %v821, 1.0
    %v1074 = vlog2.pop %v1073
    %v1075 = vmul.f32 %v1074, 0.6931472
    %v1076 = vmul.f32 -0.5, %v821
    %v1077 = vadd.f32 %v1076, 1.0
    %v1078 = vmul.f32 %v1077, %v821
    %v1079 = vand.u32 2147483647, %v821
    %vm1080 = vcmp.lt.f32.partialorder %v1079, 0.0004427343
    %v1081 = vsel %vm1080, %v1078, %v1075
    %v1082 = vadd.f32 %v823, 1.0
    %v1083 = vlog2.pop %v1082
    %v1084 = vmul.f32 %v1083, 0.6931472
    %v1085 = vmul.f32 -0.5, %v823
    %v1086 = vadd.f32 %v1085, 1.0
    %v1087 = vmul.f32 %v1086, %v823
    %v1088 = vand.u32 2147483647, %v823
    %vm1089 = vcmp.lt.f32.partialorder %v1088, 0.0004427343
    %v1090 = vsel %vm1089, %v1087, %v1084
    %v1091 = vadd.f32 %v825, 1.0
    %v1092 = vlog2.pop %v1091
    %v1093 = vmul.f32 %v1092, 0.6931472
    %v1094 = vmul.f32 -0.5, %v825
    %v1095 = vadd.f32 %v1094, 1.0
    %v1096 = vmul.f32 %v1095, %v825
    %v1097 = vand.u32 2147483647, %v825
    %vm1098 = vcmp.lt.f32.partialorder %v1097, 0.0004427343
    %v1099 = vsel %vm1098, %v1096, %v1093
    %v1100 = vadd.f32 %v827, 1.0
    %v1101 = vlog2.pop %v1100
    %v1102 = vmul.f32 %v1101, 0.6931472
    %v1103 = vmul.f32 -0.5, %v827
    %v1104 = vadd.f32 %v1103, 1.0
    %v1105 = vmul.f32 %v1104, %v827
    %v1106 = vand.u32 2147483647, %v827
    %vm1107 = vcmp.lt.f32.partialorder %v1106, 0.0004427343
    %v1108 = vsel %vm1107, %v1105, %v1102
    %v1109 = vadd.f32 %v829, 1.0
    %v1110 = vlog2.pop %v1109
    %v1111 = vmul.f32 %v1110, 0.6931472
    %v1112 = vmul.f32 -0.5, %v829
    %v1113 = vadd.f32 %v1112, 1.0
    %v1114 = vmul.f32 %v1113, %v829
    %v1115 = vand.u32 2147483647, %v829
    %vm1116 = vcmp.lt.f32.partialorder %v1115, 0.0004427343
    %v1117 = vsel %vm1116, %v1114, %v1111
    %v1118 = vadd.f32 %v670, %v838
    %v1119 = vadd.f32 %v671, %v847
    %v1120 = vadd.f32 %v672, %v856
    %v1121 = vadd.f32 %v673, %v865
    %v1122 = vadd.f32 %v674, %v874
    %v1123 = vadd.f32 %v675, %v883
    %v1124 = vadd.f32 %v676, %v892
    %v1125 = vadd.f32 %v677, %v901
    %v1126 = vadd.f32 %v678, %v910
    %v1127 = vadd.f32 %v679, %v919
    %v1128 = vadd.f32 %v680, %v928
    %v1129 = vadd.f32 %v681, %v937
    %v1130 = vadd.f32 %v682, %v946
    %v1131 = vadd.f32 %v683, %v955
    %v1132 = vadd.f32 %v684, %v964
    %v1133 = vadd.f32 %v685, %v973
    %v1134 = vadd.f32 %v686, %v982
    %v1135 = vadd.f32 %v687, %v991
    %v1136 = vadd.f32 %v688, %v1000
    %v1137 = vadd.f32 %v689, %v1009
    %v1138 = vadd.f32 %v690, %v1018
    %v1139 = vadd.f32 %v691, %v1027
    %v1140 = vadd.f32 %v692, %v1036
    %v1141 = vadd.f32 %v693, %v1045
    %v1142 = vadd.f32 %v694, %v1054
    %v1143 = vadd.f32 %v695, %v1063
    %v1144 = vadd.f32 %v696, %v1072
    %v1145 = vadd.f32 %v697, %v1081
    %v1146 = vadd.f32 %v698, %v1090
    %v1147 = vadd.f32 %v699, %v1099
    %v1148 = vadd.f32 %v700, %v1108
    %v1149 = vadd.f32 %v701, %v1117
    %v1150 = vld [vmem:[#allocation5] sm:$0xff]
    %v1151 = vld [vmem:[#allocation5 + $0x8] sm:$0xff]
    %v1152 = vld [vmem:[#allocation5 + $0x10] sm:$0xff]
    %v1153 = vld [vmem:[#allocation5 + $0x18] sm:$0xff]
    %v1154 = vld [vmem:[#allocation5 + $0x20] sm:$0xff]
    %v1155 = vld [vmem:[#allocation5 + $0x28] sm:$0xff]
    %v1156 = vld [vmem:[#allocation5 + $0x30] sm:$0xff]
    %v1157 = vld [vmem:[#allocation5 + $0x38] sm:$0xff]
    %v1158 = vld [vmem:[#allocation5 + $0x40] sm:$0xff]
    %v1159 = vld [vmem:[#allocation5 + $0x48] sm:$0xff]
    %v1160 = vld [vmem:[#allocation5 + $0x50] sm:$0xff]
    %v1161 = vld [vmem:[#allocation5 + $0x58] sm:$0xff]
    %v1162 = vld [vmem:[#allocation5 + $0x60] sm:$0xff]
    %v1163 = vld [vmem:[#allocation5 + $0x68] sm:$0xff]
    %v1164 = vld [vmem:[#allocation5 + $0x70] sm:$0xff]
    %v1165 = vld [vmem:[#allocation5 + $0x78] sm:$0xff]
    %v1166 = vld [vmem:[%s6] sm:$0x1]
    %v1168 = vlaneseq
    %v1169 = vshrl.u32 %v1168, 7
    %v1170 = vsub.s32 0, %v1169
    %v1171 = vrot.slane %v1166, %v1170
    %1173 = vmatprep.subr.mxu0 0.0
    %1174 = vmatpush1.msra.mxu0 %v1150
    %1175 = vmatprep.subr.mxu0 0.0
    %1176 = vmatpush1.msra.mxu0 %v1151
    %1177 = vmatprep.subr.mxu0 0.0
    %1178 = vmatpush1.msra.mxu0 %v1152
    %1179 = vmatprep.subr.mxu0 0.0
    %1180 = vmatpush1.msra.mxu0 %v1153
    %1181 = vmatprep.subr.mxu0 0.0
    %1182 = vmatpush1.msra.mxu0 %v1154
    %1183 = vmatprep.subr.mxu0 0.0
    %1184 = vmatpush1.msra.mxu0 %v1155
    %1185 = vmatprep.subr.mxu0 0.0
    %1186 = vmatpush1.msra.mxu0 %v1156
    %1187 = vmatprep.subr.mxu0 0.0
    %1188 = vmatpush1.msra.mxu0 %v1157
    %1189 = vmatprep.subr.mxu0 0.0
    %1190 = vmatpush1.msra.mxu0 %v1158
    %1191 = vmatprep.subr.mxu0 0.0
    %1192 = vmatpush1.msra.mxu0 %v1159
    %1193 = vmatprep.subr.mxu0 0.0
    %1194 = vmatpush1.msra.mxu0 %v1160
    %1195 = vmatprep.subr.mxu0 0.0
    %1196 = vmatpush1.msra.mxu0 %v1161
    %1197 = vmatprep.subr.mxu0 0.0
    %1198 = vmatpush1.msra.mxu0 %v1162
    %1199 = vmatprep.subr.mxu0 0.0
    %1200 = vmatpush1.msra.mxu0 %v1163
    %1201 = vmatprep.subr.mxu0 0.0
    %1202 = vmatpush1.msra.mxu0 %v1164
    %1203 = vmatprep.subr.mxu0 0.0
    %1204 = vmatpush1.msra.mxu0 %v1165
    %1205 = vmatprep.subr.mxu0 0.0
    %1206 = vmatpush1.msra.mxu0 0.0
    %1207 = vmatprep.subr.mxu0 0.0
    %1208 = vmatpush1.msra.mxu0 0.0
    %1209 = vmatprep.subr.mxu0 0.0
    %1210 = vmatpush1.msra.mxu0 0.0
    %1211 = vmatprep.subr.mxu0 0.0
    %1212 = vmatpush1.msra.mxu0 0.0
    %1213 = vmatprep.subr.mxu0 0.0
    %1214 = vmatpush1.msra.mxu0 0.0
    %1215 = vmatprep.subr.mxu0 0.0
    %1216 = vmatpush1.msra.mxu0 0.0
    %1217 = vmatprep.subr.mxu0 0.0
    %1218 = vmatpush1.msra.mxu0 0.0
    %1219 = vmatprep.subr.mxu0 0.0
    %1220 = vmatpush1.msra.mxu0 0.0
    %1221 = vmatprep.subr.mxu0 0.0
    %1222 = vmatpush1.msra.mxu0 0.0
    %1223 = vmatprep.subr.mxu0 0.0
    %1224 = vmatpush1.msra.mxu0 0.0
    %1225 = vmatprep.subr.mxu0 0.0
    %1226 = vmatpush1.msra.mxu0 0.0
    %1227 = vmatprep.subr.mxu0 0.0
    %1228 = vmatpush1.msra.mxu0 0.0
    %1229 = vmatprep.subr.mxu0 0.0
    %1230 = vmatpush1.msra.mxu0 0.0
    %1231 = vmatprep.subr.mxu0 0.0
    %1232 = vmatpush1.msra.mxu0 0.0
    %1233 = vmatprep.subr.mxu0 0.0
    %1234 = vmatpush1.msra.mxu0 0.0
    %1235 = vmatprep.subr.mxu0 0.0
    %1236 = vmatpush1.msra.mxu0 0.0
    %1237 = vmatprep.mubr.f32.mxu0 0.0
    %1238 = vmatmul.mubr.f32.gmra.mrb[0].mxu0 %v1118
    %v1239 = vpop.f32.mrb[0].mxu0
    %v1240 = vadd.f32 %v1171, %v1239
    %v1241 = vpop.f32.mrb[0].mxu0
    %1242 = vmatprep.mubr.f32.mxu0 0.0
    %1243 = vmatmul.mubr.f32.gmra.mrb[0].mxu0 %v1119
    %v1244 = vpop.f32.mrb[0].mxu0
    %v1245 = vadd.f32 %v1171, %v1244
    %v1246 = vpop.f32.mrb[0].mxu0
    %1247 = vmatprep.mubr.f32.mxu0 0.0
    %1248 = vmatmul.mubr.f32.gmra.mrb[0].mxu0 %v1120
    %v1249 = vpop.f32.mrb[0].mxu0
    %v1250 = vadd.f32 %v1171, %v1249
    %v1251 = vpop.f32.mrb[0].mxu0
    %1252 = vmatprep.mubr.f32.mxu0 0.0
    %1253 = vmatmul.mubr.f32.gmra.mrb[0].mxu0 %v1121
    %v1254 = vpop.f32.mrb[0].mxu0
    %v1255 = vadd.f32 %v1171, %v1254
    %v1256 = vpop.f32.mrb[0].mxu0
    %1257 = vmatprep.mubr.f32.mxu0 0.0
    %1258 = vmatmul.mubr.f32.gmra.mrb[0].mxu0 %v1122
    %v1259 = vpop.f32.mrb[0].mxu0
    %v1260 = vadd.f32 %v1171, %v1259
    %v1261 = vpop.f32.mrb[0].mxu0
    %1262 = vmatprep.mubr.f32.mxu0 0.0
    %1263 = vmatmul.mubr.f32.gmra.mrb[0].mxu0 %v1123
    %v1264 = vpop.f32.mrb[0].mxu0
    %v1265 = vadd.f32 %v1171, %v1264
    %v1266 = vpop.f32.mrb[0].mxu0
    %1267 = vmatprep.mubr.f32.mxu0 0.0
    %1268 = vmatmul.mubr.f32.gmra.mrb[0].mxu0 %v1124
    %v1269 = vpop.f32.mrb[0].mxu0
    %v1270 = vadd.f32 %v1171, %v1269
    %v1271 = vpop.f32.mrb[0].mxu0
    %1272 = vmatprep.mubr.f32.mxu0 0.0
    %1273 = vmatmul.mubr.f32.gmra.mrb[0].mxu0 %v1125
    %v1274 = vpop.f32.mrb[0].mxu0
    %v1275 = vadd.f32 %v1171, %v1274
    %v1276 = vpop.f32.mrb[0].mxu0
    %1277 = vmatprep.mubr.f32.mxu0 0.0
    %1278 = vmatmul.mubr.f32.gmra.mrb[0].mxu0 %v1126
    %v1279 = vpop.f32.mrb[0].mxu0
    %v1280 = vadd.f32 %v1171, %v1279
    %v1281 = vpop.f32.mrb[0].mxu0
    %1282 = vmatprep.mubr.f32.mxu0 0.0
    %1283 = vmatmul.mubr.f32.gmra.mrb[0].mxu0 %v1127
    %v1284 = vpop.f32.mrb[0].mxu0
    %v1285 = vadd.f32 %v1171, %v1284
    %v1286 = vpop.f32.mrb[0].mxu0
    %1287 = vmatprep.mubr.f32.mxu0 0.0
    %1288 = vmatmul.mubr.f32.gmra.mrb[0].mxu0 %v1128
    %v1289 = vpop.f32.mrb[0].mxu0
    %v1290 = vadd.f32 %v1171, %v1289
    %v1291 = vpop.f32.mrb[0].mxu0
    %1292 = vmatprep.mubr.f32.mxu0 0.0
    %1293 = vmatmul.mubr.f32.gmra.mrb[0].mxu0 %v1129
    %v1294 = vpop.f32.mrb[0].mxu0
    %v1295 = vadd.f32 %v1171, %v1294
    %v1296 = vpop.f32.mrb[0].mxu0
    %1297 = vmatprep.mubr.f32.mxu0 0.0
    %1298 = vmatmul.mubr.f32.gmra.mrb[0].mxu0 %v1130
    %v1299 = vpop.f32.mrb[0].mxu0
    %v1300 = vadd.f32 %v1171, %v1299
    %v1301 = vpop.f32.mrb[0].mxu0
    %1302 = vmatprep.mubr.f32.mxu0 0.0
    %1303 = vmatmul.mubr.f32.gmra.mrb[0].mxu0 %v1131
    %v1304 = vpop.f32.mrb[0].mxu0
    %v1305 = vadd.f32 %v1171, %v1304
    %v1306 = vpop.f32.mrb[0].mxu0
    %1307 = vmatprep.mubr.f32.mxu0 0.0
    %1308 = vmatmul.mubr.f32.gmra.mrb[0].mxu0 %v1132
    %v1309 = vpop.f32.mrb[0].mxu0
    %v1310 = vadd.f32 %v1171, %v1309
    %v1311 = vpop.f32.mrb[0].mxu0
    %1312 = vmatprep.mubr.f32.mxu0 0.0
    %1313 = vmatmul.mubr.f32.gmra.mrb[0].mxu0 %v1133
    %v1314 = vpop.f32.mrb[0].mxu0
    %v1315 = vadd.f32 %v1171, %v1314
    %v1316 = vpop.f32.mrb[0].mxu0
    %1317 = vmatprep.mubr.f32.mxu0 0.0
    %1318 = vmatmul.mubr.f32.gmra.mrb[0].mxu0 %v1134
    %v1319 = vpop.f32.mrb[0].mxu0
    %v1320 = vadd.f32 %v1171, %v1319
    %v1321 = vpop.f32.mrb[0].mxu0
    %1322 = vmatprep.mubr.f32.mxu0 0.0
    %1323 = vmatmul.mubr.f32.gmra.mrb[0].mxu0 %v1135
    %v1324 = vpop.f32.mrb[0].mxu0
    %v1325 = vadd.f32 %v1171, %v1324
    %v1326 = vpop.f32.mrb[0].mxu0
    %1327 = vmatprep.mubr.f32.mxu0 0.0
    %1328 = vmatmul.mubr.f32.gmra.mrb[0].mxu0 %v1136
    %v1329 = vpop.f32.mrb[0].mxu0
    %v1330 = vadd.f32 %v1171, %v1329
    %v1331 = vpop.f32.mrb[0].mxu0
    %1332 = vmatprep.mubr.f32.mxu0 0.0
    %1333 = vmatmul.mubr.f32.gmra.mrb[0].mxu0 %v1137
    %v1334 = vpop.f32.mrb[0].mxu0
    %v1335 = vadd.f32 %v1171, %v1334
    %v1336 = vpop.f32.mrb[0].mxu0
    %1337 = vmatprep.mubr.f32.mxu0 0.0
    %1338 = vmatmul.mubr.f32.gmra.mrb[0].mxu0 %v1138
    %v1339 = vpop.f32.mrb[0].mxu0
    %v1340 = vadd.f32 %v1171, %v1339
    %v1341 = vpop.f32.mrb[0].mxu0
    %1342 = vmatprep.mubr.f32.mxu0 0.0
    %1343 = vmatmul.mubr.f32.gmra.mrb[0].mxu0 %v1139
    %v1344 = vpop.f32.mrb[0].mxu0
    %v1345 = vadd.f32 %v1171, %v1344
    %v1346 = vpop.f32.mrb[0].mxu0
    %1347 = vmatprep.mubr.f32.mxu0 0.0
    %1348 = vmatmul.mubr.f32.gmra.mrb[0].mxu0 %v1140
    %v1349 = vpop.f32.mrb[0].mxu0
    %v1350 = vadd.f32 %v1171, %v1349
    %v1351 = vpop.f32.mrb[0].mxu0
    %1352 = vmatprep.mubr.f32.mxu0 0.0
    %1353 = vmatmul.mubr.f32.gmra.mrb[0].mxu0 %v1141
    %v1354 = vpop.f32.mrb[0].mxu0
    %v1355 = vadd.f32 %v1171, %v1354
    %v1356 = vpop.f32.mrb[0].mxu0
    %1357 = vmatprep.mubr.f32.mxu0 0.0
    %1358 = vmatmul.mubr.f32.gmra.mrb[0].mxu0 %v1142
    %v1359 = vpop.f32.mrb[0].mxu0
    %v1360 = vadd.f32 %v1171, %v1359
    %v1361 = vpop.f32.mrb[0].mxu0
    %1362 = vmatprep.mubr.f32.mxu0 0.0
    %1363 = vmatmul.mubr.f32.gmra.mrb[0].mxu0 %v1143
    %v1364 = vpop.f32.mrb[0].mxu0
    %v1365 = vadd.f32 %v1171, %v1364
    %v1366 = vpop.f32.mrb[0].mxu0
    %1367 = vmatprep.mubr.f32.mxu0 0.0
    %1368 = vmatmul.mubr.f32.gmra.mrb[0].mxu0 %v1144
    %v1369 = vpop.f32.mrb[0].mxu0
    %v1370 = vadd.f32 %v1171, %v1369
    %v1371 = vpop.f32.mrb[0].mxu0
    %1372 = vmatprep.mubr.f32.mxu0 0.0
    %1373 = vmatmul.mubr.f32.gmra.mrb[0].mxu0 %v1145
    %v1374 = vpop.f32.mrb[0].mxu0
    %v1375 = vadd.f32 %v1171, %v1374
    %v1376 = vpop.f32.mrb[0].mxu0
    %1377 = vmatprep.mubr.f32.mxu0 0.0
    %1378 = vmatmul.mubr.f32.gmra.mrb[0].mxu0 %v1146
    %v1379 = vpop.f32.mrb[0].mxu0
    %v1380 = vadd.f32 %v1171, %v1379
    %v1381 = vpop.f32.mrb[0].mxu0
    %1382 = vmatprep.mubr.f32.mxu0 0.0
    %1383 = vmatmul.mubr.f32.gmra.mrb[0].mxu0 %v1147
    %v1384 = vpop.f32.mrb[0].mxu0
    %v1385 = vadd.f32 %v1171, %v1384
    %v1386 = vpop.f32.mrb[0].mxu0
    %1387 = vmatprep.mubr.f32.mxu0 0.0
    %1388 = vmatmul.mubr.f32.gmra.mrb[0].mxu0 %v1148
    %v1389 = vpop.f32.mrb[0].mxu0
    %v1390 = vadd.f32 %v1171, %v1389
    %v1391 = vpop.f32.mrb[0].mxu0
    %1392 = vmatprep.mubr.f32.mxu0 0.0
    %1393 = vmatmul.mubr.f32.gmra.mrb[0].mxu0 %v1149
    %v1394 = vpop.f32.mrb[0].mxu0
    %v1395 = vadd.f32 %v1171, %v1394
    %v1396 = vpop.f32.mrb[0].mxu0
    %1397 = vdwg.mxu0
    %v1398 = vmax.f32 %v1240, 0.0
    %v1399 = vmax.f32 %v1245, 0.0
    %v1400 = vmax.f32 %v1250, 0.0
    %v1401 = vmax.f32 %v1255, 0.0
    %v1402 = vmax.f32 %v1260, 0.0
    %v1403 = vmax.f32 %v1265, 0.0
    %v1404 = vmax.f32 %v1270, 0.0
    %v1405 = vmax.f32 %v1275, 0.0
    %v1406 = vmax.f32 %v1280, 0.0
    %v1407 = vmax.f32 %v1285, 0.0
    %v1408 = vmax.f32 %v1290, 0.0
    %v1409 = vmax.f32 %v1295, 0.0
    %v1410 = vmax.f32 %v1300, 0.0
    %v1411 = vmax.f32 %v1305, 0.0
    %v1412 = vmax.f32 %v1310, 0.0
    %v1413 = vmax.f32 %v1315, 0.0
    %v1414 = vmax.f32 %v1320, 0.0
    %v1415 = vmax.f32 %v1325, 0.0
    %v1416 = vmax.f32 %v1330, 0.0
    %v1417 = vmax.f32 %v1335, 0.0
    %v1418 = vmax.f32 %v1340, 0.0
    %v1419 = vmax.f32 %v1345, 0.0
    %v1420 = vmax.f32 %v1350, 0.0
    %v1421 = vmax.f32 %v1355, 0.0
    %v1422 = vmax.f32 %v1360, 0.0
    %v1423 = vmax.f32 %v1365, 0.0
    %v1424 = vmax.f32 %v1370, 0.0
    %v1425 = vmax.f32 %v1375, 0.0
    %v1426 = vmax.f32 %v1380, 0.0
    %v1427 = vmax.f32 %v1385, 0.0
    %v1428 = vmax.f32 %v1390, 0.0
    %v1429 = vmax.f32 %v1395, 0.0
    %v1430 = vand.u32 2147483647, %v1240
    %v1431 = vand.u32 2147483647, %v1245
    %v1432 = vand.u32 2147483647, %v1250
    %v1433 = vand.u32 2147483647, %v1255
    %v1434 = vand.u32 2147483647, %v1260
    %v1435 = vand.u32 2147483647, %v1265
    %v1436 = vand.u32 2147483647, %v1270
    %v1437 = vand.u32 2147483647, %v1275
    %v1438 = vand.u32 2147483647, %v1280
    %v1439 = vand.u32 2147483647, %v1285
    %v1440 = vand.u32 2147483647, %v1290
    %v1441 = vand.u32 2147483647, %v1295
    %v1442 = vand.u32 2147483647, %v1300
    %v1443 = vand.u32 2147483647, %v1305
    %v1444 = vand.u32 2147483647, %v1310
    %v1445 = vand.u32 2147483647, %v1315
    %v1446 = vand.u32 2147483647, %v1320
    %v1447 = vand.u32 2147483647, %v1325
    %v1448 = vand.u32 2147483647, %v1330
    %v1449 = vand.u32 2147483647, %v1335
    %v1450 = vand.u32 2147483647, %v1340
    %v1451 = vand.u32 2147483647, %v1345
    %v1452 = vand.u32 2147483647, %v1350
    %v1453 = vand.u32 2147483647, %v1355
    %v1454 = vand.u32 2147483647, %v1360
    %v1455 = vand.u32 2147483647, %v1365
    %v1456 = vand.u32 2147483647, %v1370
    %v1457 = vand.u32 2147483647, %v1375
    %v1458 = vand.u32 2147483647, %v1380
    %v1459 = vand.u32 2147483647, %v1385
    %v1460 = vand.u32 2147483647, %v1390
    %v1461 = vand.u32 2147483647, %v1395
    %v1462 = vsub.f32 0.0, %v1430
    %v1463 = vsub.f32 0.0, %v1431
    %v1464 = vsub.f32 0.0, %v1432
    %v1465 = vsub.f32 0.0, %v1433
    %v1466 = vsub.f32 0.0, %v1434
    %v1467 = vsub.f32 0.0, %v1435
    %v1468 = vsub.f32 0.0, %v1436
    %v1469 = vsub.f32 0.0, %v1437
    %v1470 = vsub.f32 0.0, %v1438
    %v1471 = vsub.f32 0.0, %v1439
    %v1472 = vsub.f32 0.0, %v1440
    %v1473 = vsub.f32 0.0, %v1441
    %v1474 = vsub.f32 0.0, %v1442
    %v1475 = vsub.f32 0.0, %v1443
    %v1476 = vsub.f32 0.0, %v1444
    %v1477 = vsub.f32 0.0, %v1445
    %v1478 = vsub.f32 0.0, %v1446
    %v1479 = vsub.f32 0.0, %v1447
    %v1480 = vsub.f32 0.0, %v1448
    %v1481 = vsub.f32 0.0, %v1449
    %v1482 = vsub.f32 0.0, %v1450
    %v1483 = vsub.f32 0.0, %v1451
    %v1484 = vsub.f32 0.0, %v1452
    %v1485 = vsub.f32 0.0, %v1453
    %v1486 = vsub.f32 0.0, %v1454
    %v1487 = vsub.f32 0.0, %v1455
    %v1488 = vsub.f32 0.0, %v1456
    %v1489 = vsub.f32 0.0, %v1457
    %v1490 = vsub.f32 0.0, %v1458
    %v1491 = vsub.f32 0.0, %v1459
    %v1492 = vsub.f32 0.0, %v1460
    %v1493 = vsub.f32 0.0, %v1461
    %v1494 = vmul.f32 %v1462, 1.442695
    %v1495 = vpow.pop %v1494
    %v1496 = vmul.f32 %v1463, 1.442695
    %v1497 = vpow.pop %v1496
    %v1498 = vmul.f32 %v1464, 1.442695
    %v1499 = vpow.pop %v1498
    %v1500 = vmul.f32 %v1465, 1.442695
    %v1501 = vpow.pop %v1500
    %v1502 = vmul.f32 %v1466, 1.442695
    %v1503 = vpow.pop %v1502
    %v1504 = vmul.f32 %v1467, 1.442695
    %v1505 = vpow.pop %v1504
    %v1506 = vmul.f32 %v1468, 1.442695
    %v1507 = vpow.pop %v1506
    %v1508 = vmul.f32 %v1469, 1.442695
    %v1509 = vpow.pop %v1508
    %v1510 = vmul.f32 %v1470, 1.442695
    %v1511 = vpow.pop %v1510
    %v1512 = vmul.f32 %v1471, 1.442695
    %v1513 = vpow.pop %v1512
    %v1514 = vmul.f32 %v1472, 1.442695
    %v1515 = vpow.pop %v1514
    %v1516 = vmul.f32 %v1473, 1.442695
    %v1517 = vpow.pop %v1516
    %v1518 = vmul.f32 %v1474, 1.442695
    %v1519 = vpow.pop %v1518
    %v1520 = vmul.f32 %v1475, 1.442695
    %v1521 = vpow.pop %v1520
    %v1522 = vmul.f32 %v1476, 1.442695
    %v1523 = vpow.pop %v1522
    %v1524 = vmul.f32 %v1477, 1.442695
    %v1525 = vpow.pop %v1524
    %v1526 = vmul.f32 %v1478, 1.442695
    %v1527 = vpow.pop %v1526
    %v1528 = vmul.f32 %v1479, 1.442695
    %v1529 = vpow.pop %v1528
    %v1530 = vmul.f32 %v1480, 1.442695
    %v1531 = vpow.pop %v1530
    %v1532 = vmul.f32 %v1481, 1.442695
    %v1533 = vpow.pop %v1532
    %v1534 = vmul.f32 %v1482, 1.442695
    %v1535 = vpow.pop %v1534
    %v1536 = vmul.f32 %v1483, 1.442695
    %v1537 = vpow.pop %v1536
    %v1538 = vmul.f32 %v1484, 1.442695
    %v1539 = vpow.pop %v1538
    %v1540 = vmul.f32 %v1485, 1.442695
    %v1541 = vpow.pop %v1540
    %v1542 = vmul.f32 %v1486, 1.442695
    %v1543 = vpow.pop %v1542
    %v1544 = vmul.f32 %v1487, 1.442695
    %v1545 = vpow.pop %v1544
    %v1546 = vmul.f32 %v1488, 1.442695
    %v1547 = vpow.pop %v1546
    %v1548 = vmul.f32 %v1489, 1.442695
    %v1549 = vpow.pop %v1548
    %v1550 = vmul.f32 %v1490, 1.442695
    %v1551 = vpow.pop %v1550
    %v1552 = vmul.f32 %v1491, 1.442695
    %v1553 = vpow.pop %v1552
    %v1554 = vmul.f32 %v1492, 1.442695
    %v1555 = vpow.pop %v1554
    %v1556 = vmul.f32 %v1493, 1.442695
    %v1557 = vpow.pop %v1556
    %v1558 = vadd.f32 %v1495, 1.0
    %v1559 = vlog2.pop %v1558
    %v1560 = vmul.f32 %v1559, 0.6931472
    %v1561 = vmul.f32 -0.5, %v1495
    %v1562 = vadd.f32 %v1561, 1.0
    %v1563 = vmul.f32 %v1562, %v1495
    %v1564 = vand.u32 2147483647, %v1495
    %vm1565 = vcmp.lt.f32.partialorder %v1564, 0.0004427343
    %v1566 = vsel %vm1565, %v1563, %v1560
    %v1567 = vadd.f32 %v1497, 1.0
    %v1568 = vlog2.pop %v1567
    %v1569 = vmul.f32 %v1568, 0.6931472
    %v1570 = vmul.f32 -0.5, %v1497
    %v1571 = vadd.f32 %v1570, 1.0
    %v1572 = vmul.f32 %v1571, %v1497
    %v1573 = vand.u32 2147483647, %v1497
    %vm1574 = vcmp.lt.f32.partialorder %v1573, 0.0004427343
    %v1575 = vsel %vm1574, %v1572, %v1569
    %v1576 = vadd.f32 %v1499, 1.0
    %v1577 = vlog2.pop %v1576
    %v1578 = vmul.f32 %v1577, 0.6931472
    %v1579 = vmul.f32 -0.5, %v1499
    %v1580 = vadd.f32 %v1579, 1.0
    %v1581 = vmul.f32 %v1580, %v1499
    %v1582 = vand.u32 2147483647, %v1499
    %vm1583 = vcmp.lt.f32.partialorder %v1582, 0.0004427343
    %v1584 = vsel %vm1583, %v1581, %v1578
    %v1585 = vadd.f32 %v1501, 1.0
    %v1586 = vlog2.pop %v1585
    %v1587 = vmul.f32 %v1586, 0.6931472
    %v1588 = vmul.f32 -0.5, %v1501
    %v1589 = vadd.f32 %v1588, 1.0
    %v1590 = vmul.f32 %v1589, %v1501
    %v1591 = vand.u32 2147483647, %v1501
    %vm1592 = vcmp.lt.f32.partialorder %v1591, 0.0004427343
    %v1593 = vsel %vm1592, %v1590, %v1587
    %v1594 = vadd.f32 %v1503, 1.0
    %v1595 = vlog2.pop %v1594
    %v1596 = vmul.f32 %v1595, 0.6931472
    %v1597 = vmul.f32 -0.5, %v1503
    %v1598 = vadd.f32 %v1597, 1.0
    %v1599 = vmul.f32 %v1598, %v1503
    %v1600 = vand.u32 2147483647, %v1503
    %vm1601 = vcmp.lt.f32.partialorder %v1600, 0.0004427343
    %v1602 = vsel %vm1601, %v1599, %v1596
    %v1603 = vadd.f32 %v1505, 1.0
    %v1604 = vlog2.pop %v1603
    %v1605 = vmul.f32 %v1604, 0.6931472
    %v1606 = vmul.f32 -0.5, %v1505
    %v1607 = vadd.f32 %v1606, 1.0
    %v1608 = vmul.f32 %v1607, %v1505
    %v1609 = vand.u32 2147483647, %v1505
    %vm1610 = vcmp.lt.f32.partialorder %v1609, 0.0004427343
    %v1611 = vsel %vm1610, %v1608, %v1605
    %v1612 = vadd.f32 %v1507, 1.0
    %v1613 = vlog2.pop %v1612
    %v1614 = vmul.f32 %v1613, 0.6931472
    %v1615 = vmul.f32 -0.5, %v1507
    %v1616 = vadd.f32 %v1615, 1.0
    %v1617 = vmul.f32 %v1616, %v1507
    %v1618 = vand.u32 2147483647, %v1507
    %vm1619 = vcmp.lt.f32.partialorder %v1618, 0.0004427343
    %v1620 = vsel %vm1619, %v1617, %v1614
    %v1621 = vadd.f32 %v1509, 1.0
    %v1622 = vlog2.pop %v1621
    %v1623 = vmul.f32 %v1622, 0.6931472
    %v1624 = vmul.f32 -0.5, %v1509
    %v1625 = vadd.f32 %v1624, 1.0
    %v1626 = vmul.f32 %v1625, %v1509
    %v1627 = vand.u32 2147483647, %v1509
    %vm1628 = vcmp.lt.f32.partialorder %v1627, 0.0004427343
    %v1629 = vsel %vm1628, %v1626, %v1623
    %v1630 = vadd.f32 %v1511, 1.0
    %v1631 = vlog2.pop %v1630
    %v1632 = vmul.f32 %v1631, 0.6931472
    %v1633 = vmul.f32 -0.5, %v1511
    %v1634 = vadd.f32 %v1633, 1.0
    %v1635 = vmul.f32 %v1634, %v1511
    %v1636 = vand.u32 2147483647, %v1511
    %vm1637 = vcmp.lt.f32.partialorder %v1636, 0.0004427343
    %v1638 = vsel %vm1637, %v1635, %v1632
    %v1639 = vadd.f32 %v1513, 1.0
    %v1640 = vlog2.pop %v1639
    %v1641 = vmul.f32 %v1640, 0.6931472
    %v1642 = vmul.f32 -0.5, %v1513
    %v1643 = vadd.f32 %v1642, 1.0
    %v1644 = vmul.f32 %v1643, %v1513
    %v1645 = vand.u32 2147483647, %v1513
    %vm1646 = vcmp.lt.f32.partialorder %v1645, 0.0004427343
    %v1647 = vsel %vm1646, %v1644, %v1641
    %v1648 = vadd.f32 %v1515, 1.0
    %v1649 = vlog2.pop %v1648
    %v1650 = vmul.f32 %v1649, 0.6931472
    %v1651 = vmul.f32 -0.5, %v1515
    %v1652 = vadd.f32 %v1651, 1.0
    %v1653 = vmul.f32 %v1652, %v1515
    %v1654 = vand.u32 2147483647, %v1515
    %vm1655 = vcmp.lt.f32.partialorder %v1654, 0.0004427343
    %v1656 = vsel %vm1655, %v1653, %v1650
    %v1657 = vadd.f32 %v1517, 1.0
    %v1658 = vlog2.pop %v1657
    %v1659 = vmul.f32 %v1658, 0.6931472
    %v1660 = vmul.f32 -0.5, %v1517
    %v1661 = vadd.f32 %v1660, 1.0
    %v1662 = vmul.f32 %v1661, %v1517
    %v1663 = vand.u32 2147483647, %v1517
    %vm1664 = vcmp.lt.f32.partialorder %v1663, 0.0004427343
    %v1665 = vsel %vm1664, %v1662, %v1659
    %v1666 = vadd.f32 %v1519, 1.0
    %v1667 = vlog2.pop %v1666
    %v1668 = vmul.f32 %v1667, 0.6931472
    %v1669 = vmul.f32 -0.5, %v1519
    %v1670 = vadd.f32 %v1669, 1.0
    %v1671 = vmul.f32 %v1670, %v1519
    %v1672 = vand.u32 2147483647, %v1519
    %vm1673 = vcmp.lt.f32.partialorder %v1672, 0.0004427343
    %v1674 = vsel %vm1673, %v1671, %v1668
    %v1675 = vadd.f32 %v1521, 1.0
    %v1676 = vlog2.pop %v1675
    %v1677 = vmul.f32 %v1676, 0.6931472
    %v1678 = vmul.f32 -0.5, %v1521
    %v1679 = vadd.f32 %v1678, 1.0
    %v1680 = vmul.f32 %v1679, %v1521
    %v1681 = vand.u32 2147483647, %v1521
    %vm1682 = vcmp.lt.f32.partialorder %v1681, 0.0004427343
    %v1683 = vsel %vm1682, %v1680, %v1677
    %v1684 = vadd.f32 %v1523, 1.0
    %v1685 = vlog2.pop %v1684
    %v1686 = vmul.f32 %v1685, 0.6931472
    %v1687 = vmul.f32 -0.5, %v1523
    %v1688 = vadd.f32 %v1687, 1.0
    %v1689 = vmul.f32 %v1688, %v1523
    %v1690 = vand.u32 2147483647, %v1523
    %vm1691 = vcmp.lt.f32.partialorder %v1690, 0.0004427343
    %v1692 = vsel %vm1691, %v1689, %v1686
    %v1693 = vadd.f32 %v1525, 1.0
    %v1694 = vlog2.pop %v1693
    %v1695 = vmul.f32 %v1694, 0.6931472
    %v1696 = vmul.f32 -0.5, %v1525
    %v1697 = vadd.f32 %v1696, 1.0
    %v1698 = vmul.f32 %v1697, %v1525
    %v1699 = vand.u32 2147483647, %v1525
    %vm1700 = vcmp.lt.f32.partialorder %v1699, 0.0004427343
    %v1701 = vsel %vm1700, %v1698, %v1695
    %v1702 = vadd.f32 %v1527, 1.0
    %v1703 = vlog2.pop %v1702
    %v1704 = vmul.f32 %v1703, 0.6931472
    %v1705 = vmul.f32 -0.5, %v1527
    %v1706 = vadd.f32 %v1705, 1.0
    %v1707 = vmul.f32 %v1706, %v1527
    %v1708 = vand.u32 2147483647, %v1527
    %vm1709 = vcmp.lt.f32.partialorder %v1708, 0.0004427343
    %v1710 = vsel %vm1709, %v1707, %v1704
    %v1711 = vadd.f32 %v1529, 1.0
    %v1712 = vlog2.pop %v1711
    %v1713 = vmul.f32 %v1712, 0.6931472
    %v1714 = vmul.f32 -0.5, %v1529
    %v1715 = vadd.f32 %v1714, 1.0
    %v1716 = vmul.f32 %v1715, %v1529
    %v1717 = vand.u32 2147483647, %v1529
    %vm1718 = vcmp.lt.f32.partialorder %v1717, 0.0004427343
    %v1719 = vsel %vm1718, %v1716, %v1713
    %v1720 = vadd.f32 %v1531, 1.0
    %v1721 = vlog2.pop %v1720
    %v1722 = vmul.f32 %v1721, 0.6931472
    %v1723 = vmul.f32 -0.5, %v1531
    %v1724 = vadd.f32 %v1723, 1.0
    %v1725 = vmul.f32 %v1724, %v1531
    %v1726 = vand.u32 2147483647, %v1531
    %vm1727 = vcmp.lt.f32.partialorder %v1726, 0.0004427343
    %v1728 = vsel %vm1727, %v1725, %v1722
    %v1729 = vadd.f32 %v1533, 1.0
    %v1730 = vlog2.pop %v1729
    %v1731 = vmul.f32 %v1730, 0.6931472
    %v1732 = vmul.f32 -0.5, %v1533
    %v1733 = vadd.f32 %v1732, 1.0
    %v1734 = vmul.f32 %v1733, %v1533
    %v1735 = vand.u32 2147483647, %v1533
    %vm1736 = vcmp.lt.f32.partialorder %v1735, 0.0004427343
    %v1737 = vsel %vm1736, %v1734, %v1731
    %v1738 = vadd.f32 %v1535, 1.0
    %v1739 = vlog2.pop %v1738
    %v1740 = vmul.f32 %v1739, 0.6931472
    %v1741 = vmul.f32 -0.5, %v1535
    %v1742 = vadd.f32 %v1741, 1.0
    %v1743 = vmul.f32 %v1742, %v1535
    %v1744 = vand.u32 2147483647, %v1535
    %vm1745 = vcmp.lt.f32.partialorder %v1744, 0.0004427343
    %v1746 = vsel %vm1745, %v1743, %v1740
    %v1747 = vadd.f32 %v1537, 1.0
    %v1748 = vlog2.pop %v1747
    %v1749 = vmul.f32 %v1748, 0.6931472
    %v1750 = vmul.f32 -0.5, %v1537
    %v1751 = vadd.f32 %v1750, 1.0
    %v1752 = vmul.f32 %v1751, %v1537
    %v1753 = vand.u32 2147483647, %v1537
    %vm1754 = vcmp.lt.f32.partialorder %v1753, 0.0004427343
    %v1755 = vsel %vm1754, %v1752, %v1749
    %v1756 = vadd.f32 %v1539, 1.0
    %v1757 = vlog2.pop %v1756
    %v1758 = vmul.f32 %v1757, 0.6931472
    %v1759 = vmul.f32 -0.5, %v1539
    %v1760 = vadd.f32 %v1759, 1.0
    %v1761 = vmul.f32 %v1760, %v1539
    %v1762 = vand.u32 2147483647, %v1539
    %vm1763 = vcmp.lt.f32.partialorder %v1762, 0.0004427343
    %v1764 = vsel %vm1763, %v1761, %v1758
    %v1765 = vadd.f32 %v1541, 1.0
    %v1766 = vlog2.pop %v1765
    %v1767 = vmul.f32 %v1766, 0.6931472
    %v1768 = vmul.f32 -0.5, %v1541
    %v1769 = vadd.f32 %v1768, 1.0
    %v1770 = vmul.f32 %v1769, %v1541
    %v1771 = vand.u32 2147483647, %v1541
    %vm1772 = vcmp.lt.f32.partialorder %v1771, 0.0004427343
    %v1773 = vsel %vm1772, %v1770, %v1767
    %v1774 = vadd.f32 %v1543, 1.0
    %v1775 = vlog2.pop %v1774
    %v1776 = vmul.f32 %v1775, 0.6931472
    %v1777 = vmul.f32 -0.5, %v1543
    %v1778 = vadd.f32 %v1777, 1.0
    %v1779 = vmul.f32 %v1778, %v1543
    %v1780 = vand.u32 2147483647, %v1543
    %vm1781 = vcmp.lt.f32.partialorder %v1780, 0.0004427343
    %v1782 = vsel %vm1781, %v1779, %v1776
    %v1783 = vadd.f32 %v1545, 1.0
    %v1784 = vlog2.pop %v1783
    %v1785 = vmul.f32 %v1784, 0.6931472
    %v1786 = vmul.f32 -0.5, %v1545
    %v1787 = vadd.f32 %v1786, 1.0
    %v1788 = vmul.f32 %v1787, %v1545
    %v1789 = vand.u32 2147483647, %v1545
    %vm1790 = vcmp.lt.f32.partialorder %v1789, 0.0004427343
    %v1791 = vsel %vm1790, %v1788, %v1785
    %v1792 = vadd.f32 %v1547, 1.0
    %v1793 = vlog2.pop %v1792
    %v1794 = vmul.f32 %v1793, 0.6931472
    %v1795 = vmul.f32 -0.5, %v1547
    %v1796 = vadd.f32 %v1795, 1.0
    %v1797 = vmul.f32 %v1796, %v1547
    %v1798 = vand.u32 2147483647, %v1547
    %vm1799 = vcmp.lt.f32.partialorder %v1798, 0.0004427343
    %v1800 = vsel %vm1799, %v1797, %v1794
    %v1801 = vadd.f32 %v1549, 1.0
    %v1802 = vlog2.pop %v1801
    %v1803 = vmul.f32 %v1802, 0.6931472
    %v1804 = vmul.f32 -0.5, %v1549
    %v1805 = vadd.f32 %v1804, 1.0
    %v1806 = vmul.f32 %v1805, %v1549
    %v1807 = vand.u32 2147483647, %v1549
    %vm1808 = vcmp.lt.f32.partialorder %v1807, 0.0004427343
    %v1809 = vsel %vm1808, %v1806, %v1803
    %v1810 = vadd.f32 %v1551, 1.0
    %v1811 = vlog2.pop %v1810
    %v1812 = vmul.f32 %v1811, 0.6931472
    %v1813 = vmul.f32 -0.5, %v1551
    %v1814 = vadd.f32 %v1813, 1.0
    %v1815 = vmul.f32 %v1814, %v1551
    %v1816 = vand.u32 2147483647, %v1551
    %vm1817 = vcmp.lt.f32.partialorder %v1816, 0.0004427343
    %v1818 = vsel %vm1817, %v1815, %v1812
    %v1819 = vadd.f32 %v1553, 1.0
    %v1820 = vlog2.pop %v1819
    %v1821 = vmul.f32 %v1820, 0.6931472
    %v1822 = vmul.f32 -0.5, %v1553
    %v1823 = vadd.f32 %v1822, 1.0
    %v1824 = vmul.f32 %v1823, %v1553
    %v1825 = vand.u32 2147483647, %v1553
    %vm1826 = vcmp.lt.f32.partialorder %v1825, 0.0004427343
    %v1827 = vsel %vm1826, %v1824, %v1821
    %v1828 = vadd.f32 %v1555, 1.0
    %v1829 = vlog2.pop %v1828
    %v1830 = vmul.f32 %v1829, 0.6931472
    %v1831 = vmul.f32 -0.5, %v1555
    %v1832 = vadd.f32 %v1831, 1.0
    %v1833 = vmul.f32 %v1832, %v1555
    %v1834 = vand.u32 2147483647, %v1555
    %vm1835 = vcmp.lt.f32.partialorder %v1834, 0.0004427343
    %v1836 = vsel %vm1835, %v1833, %v1830
    %v1837 = vadd.f32 %v1557, 1.0
    %v1838 = vlog2.pop %v1837
    %v1839 = vmul.f32 %v1838, 0.6931472
    %v1840 = vmul.f32 -0.5, %v1557
    %v1841 = vadd.f32 %v1840, 1.0
    %v1842 = vmul.f32 %v1841, %v1557
    %v1843 = vand.u32 2147483647, %v1557
    %vm1844 = vcmp.lt.f32.partialorder %v1843, 0.0004427343
    %v1845 = vsel %vm1844, %v1842, %v1839
    %v1846 = vadd.f32 %v1398, %v1566
    %v1847 = vadd.f32 %v1399, %v1575
    %v1848 = vadd.f32 %v1400, %v1584
    %v1849 = vadd.f32 %v1401, %v1593
    %v1850 = vadd.f32 %v1402, %v1602
    %v1851 = vadd.f32 %v1403, %v1611
    %v1852 = vadd.f32 %v1404, %v1620
    %v1853 = vadd.f32 %v1405, %v1629
    %v1854 = vadd.f32 %v1406, %v1638
    %v1855 = vadd.f32 %v1407, %v1647
    %v1856 = vadd.f32 %v1408, %v1656
    %v1857 = vadd.f32 %v1409, %v1665
    %v1858 = vadd.f32 %v1410, %v1674
    %v1859 = vadd.f32 %v1411, %v1683
    %v1860 = vadd.f32 %v1412, %v1692
    %v1861 = vadd.f32 %v1413, %v1701
    %v1862 = vadd.f32 %v1414, %v1710
    %v1863 = vadd.f32 %v1415, %v1719
    %v1864 = vadd.f32 %v1416, %v1728
    %v1865 = vadd.f32 %v1417, %v1737
    %v1866 = vadd.f32 %v1418, %v1746
    %v1867 = vadd.f32 %v1419, %v1755
    %v1868 = vadd.f32 %v1420, %v1764
    %v1869 = vadd.f32 %v1421, %v1773
    %v1870 = vadd.f32 %v1422, %v1782
    %v1871 = vadd.f32 %v1423, %v1791
    %v1872 = vadd.f32 %v1424, %v1800
    %v1873 = vadd.f32 %v1425, %v1809
    %v1874 = vadd.f32 %v1426, %v1818
    %v1875 = vadd.f32 %v1427, %v1827
    %v1876 = vadd.f32 %v1428, %v1836
    %v1877 = vadd.f32 %v1429, %v1845
    %v1878 = vld [vmem:[%s7] sm:$0xff]
    %v1879 = vld [vmem:[%s7 + $0x8] sm:$0xff]
    %v1880 = vld [vmem:[%s7 + $0x10] sm:$0xff]
    %v1881 = vld [vmem:[%s7 + $0x18] sm:$0xff]
    %v1882 = vld [vmem:[%s7 + $0x20] sm:$0xff]
    %v1883 = vld [vmem:[%s7 + $0x28] sm:$0xff]
    %v1884 = vld [vmem:[%s7 + $0x30] sm:$0xff]
    %v1885 = vld [vmem:[%s7 + $0x38] sm:$0xff]
    %v1886 = vld [vmem:[%s7 + $0x40] sm:$0xff]
    %v1887 = vld [vmem:[%s7 + $0x48] sm:$0xff]
    %v1888 = vld [vmem:[%s7 + $0x50] sm:$0xff]
    %v1889 = vld [vmem:[%s7 + $0x58] sm:$0xff]
    %v1890 = vld [vmem:[%s7 + $0x60] sm:$0xff]
    %v1891 = vld [vmem:[%s7 + $0x68] sm:$0xff]
    %v1892 = vld [vmem:[%s7 + $0x70] sm:$0xff]
    %v1893 = vld [vmem:[%s7 + $0x78] sm:$0xff]
    %v1894 = vld [vmem:[%s7 + $0x80] sm:$0xff]
    %v1895 = vld [vmem:[%s7 + $0x88] sm:$0xff]
    %v1896 = vld [vmem:[%s7 + $0x90] sm:$0xff]
    %v1897 = vld [vmem:[%s7 + $0x98] sm:$0xff]
    %v1898 = vld [vmem:[%s7 + $0xa0] sm:$0xff]
    %v1899 = vld [vmem:[%s7 + $0xa8] sm:$0xff]
    %v1900 = vld [vmem:[%s7 + $0xb0] sm:$0xff]
    %v1901 = vld [vmem:[%s7 + $0xb8] sm:$0xff]
    %v1902 = vld [vmem:[%s7 + $0xc0] sm:$0xff]
    %v1903 = vld [vmem:[%s7 + $0xc8] sm:$0xff]
    %v1904 = vld [vmem:[%s7 + $0xd0] sm:$0xff]
    %v1905 = vld [vmem:[%s7 + $0xd8] sm:$0xff]
    %v1906 = vld [vmem:[%s7 + $0xe0] sm:$0xff]
    %v1907 = vld [vmem:[%s7 + $0xe8] sm:$0xff]
    %v1908 = vld [vmem:[%s7 + $0xf0] sm:$0xff]
    %v1909 = vld [vmem:[%s7 + $0xf8] sm:$0xff]
    %v1910 = vmul.f32 %v1878, %v1846
    %v1911 = vmul.f32 %v1879, %v1847
    %v1912 = vmul.f32 %v1880, %v1848
    %v1913 = vmul.f32 %v1881, %v1849
    %v1914 = vmul.f32 %v1882, %v1850
    %v1915 = vmul.f32 %v1883, %v1851
    %v1916 = vmul.f32 %v1884, %v1852
    %v1917 = vmul.f32 %v1885, %v1853
    %v1918 = vmul.f32 %v1886, %v1854
    %v1919 = vmul.f32 %v1887, %v1855
    %v1920 = vmul.f32 %v1888, %v1856
    %v1921 = vmul.f32 %v1889, %v1857
    %v1922 = vmul.f32 %v1890, %v1858
    %v1923 = vmul.f32 %v1891, %v1859
    %v1924 = vmul.f32 %v1892, %v1860
    %v1925 = vmul.f32 %v1893, %v1861
    %v1926 = vmul.f32 %v1894, %v1862
    %v1927 = vmul.f32 %v1895, %v1863
    %v1928 = vmul.f32 %v1896, %v1864
    %v1929 = vmul.f32 %v1897, %v1865
    %v1930 = vmul.f32 %v1898, %v1866
    %v1931 = vmul.f32 %v1899, %v1867
    %v1932 = vmul.f32 %v1900, %v1868
    %v1933 = vmul.f32 %v1901, %v1869
    %v1934 = vmul.f32 %v1902, %v1870
    %v1935 = vmul.f32 %v1903, %v1871
    %v1936 = vmul.f32 %v1904, %v1872
    %v1937 = vmul.f32 %v1905, %v1873
    %v1938 = vmul.f32 %v1906, %v1874
    %v1939 = vmul.f32 %v1907, %v1875
    %v1940 = vmul.f32 %v1908, %v1876
    %v1941 = vmul.f32 %v1909, %v1877
    %v1942 = vlaneseq
    %v1943 = vshrl.u32 %v1942, 7
    %v1944 = vld [vmem:[%s1] sm:$0x3]
    %v1945 = vlaneseq
    %v1946 = vshrl.u32 %v1945, 7
    %v1947 = vsub.s32 0, %v1946
    %v1948 = vrot.slane %v1944, %v1947
    %v1949 = vlaneseq
    %v1950 = vshrl.u32 %v1949, 7
    %v1951 = vsub.s32 1, %v1950
    %v1952 = vrot.slane %v1944, %v1951
    %vm1953 = vcmp.eq.s32.totalorder %v1948, %v1943
    %vm1954 = vcmp.eq.s32.totalorder %v1952, %v1943
    %v1955 = vsel %vm1953, 1, 0
    %v1956 = vsel %vm1954, 1, 0
    %v1957 = vcvt.s32.f32 %v1955
    %v1958 = vcvt.s32.f32 %v1956
    %v1959 = vld [vmem:[#allocation7] sm:$0xff]
    %1960 = vmatprep.subr.mxu0 0.0
    %1961 = vmatpush1.msra.mxu0 %v1910
    %1962 = vmatprep.subr.mxu0 0.0
    %1963 = vmatpush1.msra.mxu0 %v1911
    %1964 = vmatprep.subr.mxu0 0.0
    %1965 = vmatpush1.msra.mxu0 %v1912
    %1966 = vmatprep.subr.mxu0 0.0
    %1967 = vmatpush1.msra.mxu0 %v1913
    %1968 = vmatprep.subr.mxu0 0.0
    %1969 = vmatpush1.msra.mxu0 %v1914
    %1970 = vmatprep.subr.mxu0 0.0
    %1971 = vmatpush1.msra.mxu0 %v1915
    %1972 = vmatprep.subr.mxu0 0.0
    %1973 = vmatpush1.msra.mxu0 %v1916
    %1974 = vmatprep.subr.mxu0 0.0
    %1975 = vmatpush1.msra.mxu0 %v1917
    %1976 = vmatprep.subr.mxu0 0.0
    %1977 = vmatpush1.msra.mxu0 %v1918
    %1978 = vmatprep.subr.mxu0 0.0
    %1979 = vmatpush1.msra.mxu0 %v1919
    %1980 = vmatprep.subr.mxu0 0.0
    %1981 = vmatpush1.msra.mxu0 %v1920
    %1982 = vmatprep.subr.mxu0 0.0
    %1983 = vmatpush1.msra.mxu0 %v1921
    %1984 = vmatprep.subr.mxu0 0.0
    %1985 = vmatpush1.msra.mxu0 %v1922
    %1986 = vmatprep.subr.mxu0 0.0
    %1987 = vmatpush1.msra.mxu0 %v1923
    %1988 = vmatprep.subr.mxu0 0.0
    %1989 = vmatpush1.msra.mxu0 %v1924
    %1990 = vmatprep.subr.mxu0 0.0
    %1991 = vmatpush1.msra.mxu0 %v1925
    %1992 = vmatprep.subr.mxu0 0.0
    %1993 = vmatpush1.msra.mxu0 %v1926
    %1994 = vmatprep.subr.mxu0 0.0
    %1995 = vmatpush1.msra.mxu0 %v1927
    %1996 = vmatprep.subr.mxu0 0.0
    %1997 = vmatpush1.msra.mxu0 %v1928
    %1998 = vmatprep.subr.mxu0 0.0
    %1999 = vmatpush1.msra.mxu0 %v1929
    %2000 = vmatprep.subr.mxu0 0.0
    %2001 = vmatpush1.msra.mxu0 %v1930
    %2002 = vmatprep.subr.mxu0 0.0
    %2003 = vmatpush1.msra.mxu0 %v1931
    %2004 = vmatprep.subr.mxu0 0.0
    %2005 = vmatpush1.msra.mxu0 %v1932
    %2006 = vmatprep.subr.mxu0 0.0
    %2007 = vmatpush1.msra.mxu0 %v1933
    %2008 = vmatprep.subr.mxu0 0.0
    %2009 = vmatpush1.msra.mxu0 %v1934
    %2010 = vmatprep.subr.mxu0 0.0
    %2011 = vmatpush1.msra.mxu0 %v1935
    %2012 = vmatprep.subr.mxu0 0.0
    %2013 = vmatpush1.msra.mxu0 %v1936
    %2014 = vmatprep.subr.mxu0 0.0
    %2015 = vmatpush1.msra.mxu0 %v1937
    %2016 = vmatprep.subr.mxu0 0.0
    %2017 = vmatpush1.msra.mxu0 %v1938
    %2018 = vmatprep.subr.mxu0 0.0
    %2019 = vmatpush1.msra.mxu0 %v1939
    %2020 = vmatprep.subr.mxu0 0.0
    %2021 = vmatpush1.msra.mxu0 %v1940
    %2022 = vmatprep.subr.mxu0 0.0
    %2023 = vmatpush1.msra.mxu0 %v1941
    %2024 = vmatprep.mubr.f32.mxu0 %v1958
    %2025 = vmatmul.mubr.f32.gmra.mrb[0].mxu0 %v1957
    %v2026 = vpop.f32.mrb[0].mxu0
    %v2027 = vadd.f32 0.0, %v2026
    %v2028 = vpop.f32.mrb[0].mxu0
    %2029 = vdwg.mxu0
    %v2030 = vadd.f32 %v1959, %v2027
    %2031 = vst [vmem:[#allocation7] sm:$0xff] %v2030
    // Predicated region
    $region46: #{tpu_custom_call.1} parent=1 // pred_check
      _
    $region47: #{tpu_custom_call.1} parent=1 // pred_check_branch
      %2033 = sbr.rel (0) target = $region49
    $region48: #{tpu_custom_call.1} parent=1 // pred_region
      %s2035 = ssub.s32 128, 128
      %2036 = vsyncadd [#allocation4], %s2035
      %s2038 = sshll.u32 [#allocation7], 4
      %s2039 = int_to_ptr.vmem [resolvable:$true] %s2038
      %2041 = dma.vmem_to_hbm [thread:$0]  %s2039, 128, %s8, [#allocation4]
    $region49: #{tpu_custom_call.1} parent=1 // pred_fallthru
      _
    // Predicated region
    $region50: #{tpu_custom_call.1} parent=1 // pred_check
      _
    $region51: #{tpu_custom_call.1} parent=1 // pred_check_branch
      %2043 = sbr.rel (0) target = $region53
    $region52: #{tpu_custom_call.1} parent=1 // pred_region
      %2044 = dma.done [#allocation4], 128
    $region53: #{tpu_custom_call.1} parent=1 // pred_fallthru
      _
    %2045 = vsyncpa [#allocation3], 1
    %2046 = vsyncpa [#allocation6], 1
    %2047 = vsyncpa [#allocation4], 1

</llo_original>
